<compile_context>
chip_gen: v7x
topology: tpu7x:2x2x1
jax: 0.10.0
libtpu: 0.0.40
codegen_flags: <defaults>
</compile_context>

<pallas_src>
import jax
import jax.numpy as jnp
from jax import lax
from jax.experimental import pallas as pl
from jax.experimental.pallas import tpu as pltpu


def self_attention(x, wq, bq, wk, bk, wv, bv, gamma, *, tq=None, tk=None):
    """x: (B, C, N) f32 channels-first.  Conv1d(k=1) weights given as (Cout, Cin).

    Note: bk is accepted for API parity but mathematically cancels in the
    row-wise softmax, so it does not enter the computation.
    """
    B, C, N = x.shape

    # ---- tile selection (256 fills the v6e/v7x MXU; 128 for tiny N) --------
    if tq is None:
        tq = 256 if N > 128 else 128
    if tk is None:
        tk = 256 if N > 128 else 128
    nq = pl.cdiv(N, tq)
    nk = pl.cdiv(N, tk)
    npq = nq * tq
    npk = nk * tk
    needs_mask = (npk != N)

    # Augmented score-key channel count: C columns of (Wq^T Wk) x_j, one column
    # holding the surviving bias term r_j = (Wk^T bq).x_j, zero-padded to a
    # multiple of 8 for clean sublane alignment of the query cache.
    c_aug = ((C + 1 + 7) // 8) * 8

    f32 = jnp.float32
    x32 = x.astype(f32)

    # ---- hoisted per-batch projections (plain XLA, O(C^2 N)) ---------------
    m_mat = wq.T.astype(f32) @ wk.astype(f32)                      # (C, C)
    wkbq = wk.T.astype(f32) @ bq.astype(f32)                       # (C,)
    kp = jnp.einsum("cd,bdn->bnc", m_mat, x32)                     # (B, N, C)
    r = jnp.einsum("d,bdn->bn", wkbq, x32)                         # (B, N)
    k_aug = jnp.concatenate([kp, r[..., None]], axis=-1)           # (B, N, C+1)
    if c_aug > C + 1:
        k_aug = jnp.pad(k_aug, ((0, 0), (0, 0), (0, c_aug - C - 1)))
    k_aug = k_aug.astype(jnp.bfloat16)                             # (B, N, c_aug)
    v = (jnp.einsum("od,bdn->bon", wv.astype(f32), x32)
         + bv.astype(f32)[None, :, None]).astype(jnp.bfloat16)     # (B, C, N)

    # ---- pad the sequence axis to whole tiles -------------------------------
    xq_in = x if npq == N else jnp.pad(x, ((0, 0), (0, 0), (0, npq - N)))
    if npk != N:
        k_aug = jnp.pad(k_aug, ((0, 0), (0, npk - N), (0, 0)))
        v = jnp.pad(v, ((0, 0), (0, 0), (0, npk - N)))

    gamma2 = jnp.asarray(gamma, f32).reshape(1, 1)

    # ---- the flash kernel ----------------------------------------------------
    def kernel(xq_ref,     # (1, C, Tq)   f32  query / residual tile
               k_ref,      # (1, Tk, c_aug) bf16  [ (Wq^T Wk)x ; r ; 0.. ] rows
               v_ref,      # (1, C, Tk)   bf16  values
               gamma_ref,  # (1, 1)       f32   SMEM scalar
               out_ref,    # (1, C, Tq)
               q_sc,       # (c_aug, Tq)  bf16  cached augmented query tile
               m_sc, l_sc, acc_sc):
        ki = pl.program_id(2)
        nk_ = pl.num_programs(2)

        @pl.when(ki == 0)
        def _init():
            m_sc[...] = jnp.full(m_sc.shape, -jnp.inf, m_sc.dtype)
            l_sc[...] = jnp.zeros(l_sc.shape, l_sc.dtype)
            acc_sc[...] = jnp.zeros(acc_sc.shape, acc_sc.dtype)
            # Cache the bf16 query tile once per key sweep; the extra constant
            # rows fold the key-side bias term into the score matmul.
            q_sc[:C, :] = xq_ref[0].astype(jnp.bfloat16)
            q_sc[C:, :] = jnp.ones((c_aug - C, tq), jnp.bfloat16)

        # scores s[j, i] = x_i^T (Wq^T Wk) x_j + (Wk^T bq).x_j
        # -> plain (Tk, c_aug) @ (c_aug, Tq) MXU matmul, no transposes.
        s = jnp.dot(k_ref[0], q_sc[...],
                    preferred_element_type=jnp.float32)            # (Tk, Tq)

        if needs_mask:
            kpos = ki * tk + lax.broadcasted_iota(jnp.int32, s.shape, 0)
            s = jnp.where(kpos < N, s, -jnp.inf)

        # Online softmax along the key axis (axis 0); stats are (1, Tq) rows.
        m_prev = m_sc[...]
        m_new = jnp.maximum(m_prev, jnp.max(s, axis=0, keepdims=True))
        alpha = jnp.exp(m_prev - m_new)                             # (1, Tq)
        p = jnp.exp(s - m_new)                                      # (Tk, Tq) f32
        l_sc[...] = alpha * l_sc[...] + jnp.sum(p, axis=0, keepdims=True)
        m_sc[...] = m_new

        # acc[c, i] += sum_j v[c, j] * p[j, i]  (bf16 MXU in, f32 acc).
        pv = jnp.dot(v_ref[0], p.astype(jnp.bfloat16),
                     preferred_element_type=jnp.float32)            # (C, Tq)
        acc_sc[...] = acc_sc[...] * alpha + pv

        @pl.when(ki == nk_ - 1)
        def _finalize():
            scale = gamma_ref[0, 0] / l_sc[...]      # exact f32 divide, (1,Tq)
            out_ref[0] = (acc_sc[...] * scale + xq_ref[0]).astype(out_ref.dtype)

    # ---- VMEM budget (double-buffered inputs/outputs + scratch + temps) -----
    vmem_bytes = (
        2 * C * tq * 4            # x query tile (f32, double-buffered)
        + 2 * tk * c_aug * 2      # k_aug tile (bf16)
        + 2 * C * tk * 2          # v tile (bf16)
        + 2 * C * tq * 4          # out tile (f32)
        + c_aug * tq * 2          # q cache
        + 2 * tq * 4 * 2          # m, l
        + C * tq * 4              # accumulator
        + 6 * tk * tq * 4         # score / exp temporaries (headroom)
    )
    vmem_limit = int(min(max(2 * vmem_bytes, 32 * 1024 * 1024), 64 * 1024 * 1024))

    cost = pl.CostEstimate(
        flops=int(2 * B * npq * npk * (c_aug + C)),
        transcendentals=int(B * npq * npk + B * npq * nk),
        bytes_accessed=int(4 * B * C * npq                 # x read
                           + 2 * B * npk * (c_aug + C) * nq  # k/v re-streamed per qi
                           + 4 * B * C * npq))              # out write

    out = pl.pallas_call(
        kernel,
        out_shape=jax.ShapeDtypeStruct((B, C, npq), x.dtype),
        grid_spec=pltpu.PrefetchScalarGridSpec(
            num_scalar_prefetch=0,
            grid=(B, nq, nk),
            in_specs=[
                pl.BlockSpec((1, C, tq), lambda b, qi, ki: (b, 0, qi)),     # x (query/residual)
                pl.BlockSpec((1, tk, c_aug), lambda b, qi, ki: (b, ki, 0)), # K'_aug (pre-transposed)
                pl.BlockSpec((1, C, tk), lambda b, qi, ki: (b, 0, ki)),     # V
                pl.BlockSpec((1, 1), lambda b, qi, ki: (0, 0),
                             memory_space=pltpu.MemorySpace.SMEM),          # gamma
            ],
            out_specs=pl.BlockSpec((1, C, tq), lambda b, qi, ki: (b, 0, qi)),
            scratch_shapes=[
                pltpu.VMEM((c_aug, tq), jnp.bfloat16),   # cached augmented query
                pltpu.VMEM((1, tq), jnp.float32),        # running max
                pltpu.VMEM((1, tq), jnp.float32),        # running sum
                pltpu.VMEM((C, tq), jnp.float32),        # output accumulator
            ],
        ),
        compiler_params=pltpu.CompilerParams(
            dimension_semantics=("parallel", "parallel", "arbitrary"),
            vmem_limit_bytes=vmem_limit),
        cost_estimate=cost,
    )(xq_in, k_aug, v, gamma2)

    if npq != N:
        out = out[:, :, :N]
    return out


def self_attention_ref(x, wq, bq, wk, bk, wv, bv, gamma):
    """Pure-JAX reference mirroring the PyTorch forward."""
    q = jnp.einsum("oc,bcn->bon", wq, x) + bq[None, :, None]
    k = jnp.einsum("oc,bcn->bon", wk, x) + bk[None, :, None]
    v = jnp.einsum("oc,bcn->bon", wv, x) + bv[None, :, None]
    energy = jnp.einsum("bci,bcj->bij", q, k)
    attn = jax.nn.softmax(energy, axis=-1)
    out = jnp.einsum("bcj,bij->bci", v, attn)
    return gamma[0] * out + x


if __name__ == "__main__":
    def run_case(B, C, N, key):
        C8 = max(C // 8, 1)
        kx, kq, kk_, kv, kbq, kbk, kbv = jax.random.split(key, 7)
        x = jax.random.normal(kx, (B, C, N), dtype=jnp.float32)
        scale = 1.0 / jnp.sqrt(jnp.float32(C))
        wq = jax.random.uniform(kq, (C8, C), jnp.float32, -scale, scale)
        wk = jax.random.uniform(kk_, (C8, C), jnp.float32, -scale, scale)
        wv = jax.random.uniform(kv, (C, C), jnp.float32, -scale, scale)
        bq = jax.random.uniform(kbq, (C8,), jnp.float32, -scale, scale)
        bk = jax.random.uniform(kbk, (C8,), jnp.float32, -scale, scale)
        bv = jax.random.uniform(kbv, (C,), jnp.float32, -scale, scale)
        # PyTorch initializes gamma to zeros; use a nonzero value so the
        # attention path is exercised.
        gamma = jnp.array([0.5], dtype=jnp.float32)

        out = jax.block_until_ready(self_attention(x, wq, bq, wk, bk, wv, bv, gamma))
        ref = self_attention_ref(x, wq, bq, wk, bk, wv, bv, gamma)
        assert out.shape == (B, C, N)
        # Tolerance loosened for bf16 MXU inputs (f32 accumulation).
        assert jnp.allclose(out, ref, atol=5e-2, rtol=5e-2), \
            f"mismatch vs reference (B={B}, C={C}, N={N})"

    key = jax.random.PRNGKey(0)
    k1, k2 = jax.random.split(key)
    run_case(2, 32, 384, k1)   # multi key-tile online softmax + padded/masked tail
    run_case(1, 16, 128, k2)   # small single-tile case, no padding

    print("KERNEL_OK")
</pallas_src>

<mosaic_0001>
module attributes {stable_mosaic.version = 11 : i64} {
  func.func @kernel(%arg0: i32, %arg1: i32, %arg2: i32, %arg3: memref<1x32x256xf32, #tpu.memory_space<vmem>>, %arg4: memref<1x256x40xbf16, #tpu.memory_space<vmem>>, %arg5: memref<1x32x256xbf16, #tpu.memory_space<vmem>>, %arg6: memref<1x1xf32, #tpu.memory_space<smem>>, %arg7: memref<1x32x256xf32, #tpu.memory_space<vmem>>, %arg8: memref<40x256xbf16, #tpu.memory_space<vmem>>, %arg9: memref<1x256xf32, #tpu.memory_space<vmem>>, %arg10: memref<1x256xf32, #tpu.memory_space<vmem>>, %arg11: memref<32x256xf32, #tpu.memory_space<vmem>>) attributes {dimension_semantics = [#tpu.dimension_semantics<parallel>, #tpu.dimension_semantics<parallel>, #tpu.dimension_semantics<arbitrary>], iteration_bounds = array<i64: 2, 2, 2>, scalar_prefetch = 0 : i64, scratch_operands = 4 : i64, tpu.core_type = #tpu.core_type<tc>, window_params = [{transform_indices = @transform_0, window_bounds = array<i64: 1, 32, 256>}, {transform_indices = @transform_1, window_bounds = array<i64: 1, 256, 40>}, {transform_indices = @transform_2, window_bounds = array<i64: 1, 32, 256>}, {transform_indices = @transform_3, window_bounds = array<i64: 1, 1>}, {transform_indices = @transform_4, window_bounds = array<i64: 1, 32, 256>}]} {
    %c0_i32 = arith.constant 0 : i32
    %0 = arith.cmpi eq, %arg2, %c0_i32 : i32
    %1 = arith.extui %0 : i1 to i32
    %c0_i32_0 = arith.constant 0 : i32
    %2 = arith.cmpi ne, %1, %c0_i32_0 : i32
    scf.if %2 {
      %cst_25 = arith.constant 0xFF800000 : f32
      %43 = vector.broadcast %cst_25 : f32 to vector<1x256xf32>
      %c0_26 = arith.constant 0 : index
      %c0_27 = arith.constant 0 : index
      %44 = vector.load %arg9[%c0_26, %c0_27] : memref<1x256xf32, #tpu.memory_space<vmem>>, vector<1x256xf32>
      tpu.vector_store %arg9[%c0_26, %c0_27], %43 {strides = array<i32>} : memref<1x256xf32, #tpu.memory_space<vmem>>, vector<1x256xf32>,
      %cst_28 = arith.constant 0.000000e+00 : f32
      %45 = vector.broadcast %cst_28 : f32 to vector<1x256xf32>
      %c0_29 = arith.constant 0 : index
      %c0_30 = arith.constant 0 : index
      %46 = vector.load %arg10[%c0_29, %c0_30] : memref<1x256xf32, #tpu.memory_space<vmem>>, vector<1x256xf32>
      tpu.vector_store %arg10[%c0_29, %c0_30], %45 {strides = array<i32>} : memref<1x256xf32, #tpu.memory_space<vmem>>, vector<1x256xf32>,
      %cst_31 = arith.constant 0.000000e+00 : f32
      %47 = vector.broadcast %cst_31 : f32 to vector<32x256xf32>
      %c0_32 = arith.constant 0 : index
      %c0_33 = arith.constant 0 : index
      %48 = vector.load %arg11[%c0_32, %c0_33] : memref<32x256xf32, #tpu.memory_space<vmem>>, vector<32x256xf32>
      tpu.vector_store %arg11[%c0_32, %c0_33], %47 {strides = array<i32>} : memref<32x256xf32, #tpu.memory_space<vmem>>, vector<32x256xf32>,
      %c0_34 = arith.constant 0 : index
      %c0_35 = arith.constant 0 : index
      %c0_36 = arith.constant 0 : index
      %49 = vector.load %arg3[%c0_34, %c0_35, %c0_36] : memref<1x32x256xf32, #tpu.memory_space<vmem>>, vector<1x32x256xf32>
      %50 = vector.shape_cast %49 : vector<1x32x256xf32> to vector<32x256xf32>
      %51 = arith.truncf %50 : vector<32x256xf32> to vector<32x256xbf16>
      %c0_37 = arith.constant 0 : index
      %c0_38 = arith.constant 0 : index
      %52 = vector.load %arg8[%c0_37, %c0_38] : memref<40x256xbf16, #tpu.memory_space<vmem>>, vector<32x256xbf16>
      tpu.vector_store %arg8[%c0_37, %c0_38], %51 {strides = array<i32>} : memref<40x256xbf16, #tpu.memory_space<vmem>>, vector<32x256xbf16>,
      %cst_39 = arith.constant 1.000000e+00 : bf16
      %53 = vector.broadcast %cst_39 : bf16 to vector<8x256xbf16>
      %c32 = arith.constant 32 : index
      %c0_40 = arith.constant 0 : index
      %54 = vector.load %arg8[%c32, %c0_40] : memref<40x256xbf16, #tpu.memory_space<vmem>>, vector<8x256xbf16>
      tpu.vector_store %arg8[%c32, %c0_40], %53 {strides = array<i32>} : memref<40x256xbf16, #tpu.memory_space<vmem>>, vector<8x256xbf16>,
    } else {
    }
    %c0 = arith.constant 0 : index
    %c0_1 = arith.constant 0 : index
    %c0_2 = arith.constant 0 : index
    %3 = vector.load %arg4[%c0, %c0_1, %c0_2] : memref<1x256x40xbf16, #tpu.memory_space<vmem>>, vector<1x256x40xbf16>
    %4 = vector.shape_cast %3 : vector<1x256x40xbf16> to vector<256x40xbf16>
    %c0_3 = arith.constant 0 : index
    %c0_4 = arith.constant 0 : index
    %5 = vector.load %arg8[%c0_3, %c0_4] : memref<40x256xbf16, #tpu.memory_space<vmem>>, vector<40x256xbf16>
    %cst = arith.constant dense<0.000000e+00> : vector<256x256xf32>
    %6 = tpu.matmul %4, %5, %cst {dimension_numbers = #tpu.dot_dimension_numbers<[1], [0], [0], [1], [0, 0, 1, 1], [], []>} : vector<256x40xbf16>, vector<40x256xbf16>, vector<256x256xf32> -> vector<256x256xf32>
    %c256_i32 = arith.constant 256 : i32
    %7 = arith.muli %arg2, %c256_i32 : i32
    %8 = tpu.iota {dimensions = array<i32: 0>} : vector<256x256xi32>
    %9 = vector.broadcast %7 : i32 to vector<256x256xi32>
    %10 = arith.addi %9, %8 : vector<256x256xi32>
    %c384_i32 = arith.constant 384 : i32
    %11 = vector.broadcast %c384_i32 : i32 to vector<256x256xi32>
    %12 = arith.cmpi slt, %10, %11 : vector<256x256xi32>
    %cst_5 = arith.constant 0xFF800000 : f32
    %13 = vector.broadcast %cst_5 : f32 to vector<256x256xf32>
    %14 = arith.select %12, %6, %13 : vector<256x256xi1>, vector<256x256xf32>
    %c0_6 = arith.constant 0 : index
    %c0_7 = arith.constant 0 : index
    %15 = vector.load %arg9[%c0_6, %c0_7] : memref<1x256xf32, #tpu.memory_space<vmem>>, vector<1x256xf32>
    %cst_8 = arith.constant dense<0xFF800000> : vector<256xf32>
    %16 = vector.multi_reduction <maximumf>, %14, %cst_8 [0] : vector<256x256xf32> to vector<256xf32>
    %17 = vector.shape_cast %16 : vector<256xf32> to vector<1x256xf32>
    %18 = arith.maximumf %15, %17 : vector<1x256xf32>
    %19 = arith.subf %15, %18 : vector<1x256xf32>
    %20 = math.exp %19 : vector<1x256xf32>
    %21 = vector.broadcast %18 : vector<1x256xf32> to vector<256x256xf32>
    %22 = arith.subf %14, %21 : vector<256x256xf32>
    %23 = math.exp %22 : vector<256x256xf32>
    %c0_9 = arith.constant 0 : index
    %c0_10 = arith.constant 0 : index
    %24 = vector.load %arg10[%c0_9, %c0_10] : memref<1x256xf32, #tpu.memory_space<vmem>>, vector<1x256xf32>
    %25 = arith.mulf %20, %24 : vector<1x256xf32>
    %cst_11 = arith.constant dense<0.000000e+00> : vector<256xf32>
    %26 = vector.multi_reduction <add>, %23, %cst_11 [0] : vector<256x256xf32> to vector<256xf32>
    %27 = vector.shape_cast %26 : vector<256xf32> to vector<1x256xf32>
    %28 = arith.addf %25, %27 : vector<1x256xf32>
    %c0_12 = arith.constant 0 : index
    %c0_13 = arith.constant 0 : index
    %29 = vector.load %arg10[%c0_12, %c0_13] : memref<1x256xf32, #tpu.memory_space<vmem>>, vector<1x256xf32>
    tpu.vector_store %arg10[%c0_12, %c0_13], %28 {strides = array<i32>} : memref<1x256xf32, #tpu.memory_space<vmem>>, vector<1x256xf32>,
    %c0_14 = arith.constant 0 : index
    %c0_15 = arith.constant 0 : index
    %30 = vector.load %arg9[%c0_14, %c0_15] : memref<1x256xf32, #tpu.memory_space<vmem>>, vector<1x256xf32>
    tpu.vector_store %arg9[%c0_14, %c0_15], %18 {strides = array<i32>} : memref<1x256xf32, #tpu.memory_space<vmem>>, vector<1x256xf32>,
    %c0_16 = arith.constant 0 : index
    %c0_17 = arith.constant 0 : index
    %c0_18 = arith.constant 0 : index
    %31 = vector.load %arg5[%c0_16, %c0_17, %c0_18] : memref<1x32x256xbf16, #tpu.memory_space<vmem>>, vector<1x32x256xbf16>
    %32 = vector.shape_cast %31 : vector<1x32x256xbf16> to vector<32x256xbf16>
    %33 = arith.truncf %23 : vector<256x256xf32> to vector<256x256xbf16>
    %cst_19 = arith.constant dense<0.000000e+00> : vector<32x256xf32>
    %34 = tpu.matmul %32, %33, %cst_19 {dimension_numbers = #tpu.dot_dimension_numbers<[1], [0], [0], [1], [0, 0, 1, 1], [], []>} : vector<32x256xbf16>, vector<256x256xbf16>, vector<32x256xf32> -> vector<32x256xf32>
    %c0_20 = arith.constant 0 : index
    %c0_21 = arith.constant 0 : index
    %35 = vector.load %arg11[%c0_20, %c0_21] : memref<32x256xf32, #tpu.memory_space<vmem>>, vector<32x256xf32>
    %36 = vector.broadcast %20 : vector<1x256xf32> to vector<32x256xf32>
    %37 = arith.mulf %35, %36 : vector<32x256xf32>
    %38 = arith.addf %37, %34 : vector<32x256xf32>
    %c0_22 = arith.constant 0 : index
    %c0_23 = arith.constant 0 : index
    %39 = vector.load %arg11[%c0_22, %c0_23] : memref<32x256xf32, #tpu.memory_space<vmem>>, vector<32x256xf32>
    tpu.vector_store %arg11[%c0_22, %c0_23], %38 {strides = array<i32>} : memref<32x256xf32, #tpu.memory_space<vmem>>, vector<32x256xf32>,
    %c1_i32 = arith.constant 1 : i32
    %40 = arith.cmpi eq, %arg2, %c1_i32 : i32
    %41 = arith.extui %40 : i1 to i32
    %c0_i32_24 = arith.constant 0 : i32
    %42 = arith.cmpi ne, %41, %c0_i32_24 : i32
    scf.if %42 {
      %c0_25 = arith.constant 0 : index
      %c0_26 = arith.constant 0 : index
      %43 = memref.load %arg6[%c0_25, %c0_26] : memref<1x1xf32, #tpu.memory_space<smem>>
      %c0_27 = arith.constant 0 : index
      %c0_28 = arith.constant 0 : index
      %44 = vector.load %arg10[%c0_27, %c0_28] : memref<1x256xf32, #tpu.memory_space<vmem>>, vector<1x256xf32>
      %45 = vector.broadcast %43 : f32 to vector<1x256xf32>
      %46 = arith.divf %45, %44 : vector<1x256xf32>
      %c0_29 = arith.constant 0 : index
      %c0_30 = arith.constant 0 : index
      %47 = vector.load %arg11[%c0_29, %c0_30] : memref<32x256xf32, #tpu.memory_space<vmem>>, vector<32x256xf32>
      %48 = vector.broadcast %46 : vector<1x256xf32> to vector<32x256xf32>
      %49 = arith.mulf %47, %48 : vector<32x256xf32>
      %c0_31 = arith.constant 0 : index
      %c0_32 = arith.constant 0 : index
      %c0_33 = arith.constant 0 : index
      %50 = vector.load %arg3[%c0_31, %c0_32, %c0_33] : memref<1x32x256xf32, #tpu.memory_space<vmem>>, vector<1x32x256xf32>
      %51 = vector.shape_cast %50 : vector<1x32x256xf32> to vector<32x256xf32>
      %52 = arith.addf %49, %51 : vector<32x256xf32>
      %c0_34 = arith.constant 0 : index
      %c0_35 = arith.constant 0 : index
      %c0_36 = arith.constant 0 : index
      %53 = vector.load %arg7[%c0_34, %c0_35, %c0_36] : memref<1x32x256xf32, #tpu.memory_space<vmem>>, vector<1x32x256xf32>
      %54 = vector.shape_cast %53 : vector<1x32x256xf32> to vector<32x256xf32>
      %55 = vector.shape_cast %52 : vector<32x256xf32> to vector<1x32x256xf32>
      tpu.vector_store %arg7[%c0_34, %c0_35, %c0_36], %55 {strides = array<i32>} : memref<1x32x256xf32, #tpu.memory_space<vmem>>, vector<1x32x256xf32>,
    } else {
    }
    return
  }
  func.func @transform_0(%arg0: i32, %arg1: i32, %arg2: i32) -> (i32, i32, i32) {
    %c0_i32 = arith.constant 0 : i32
    %c0_i32_0 = arith.constant 0 : i32
    return %arg0, %c0_i32, %arg1 : i32, i32, i32
  }
  func.func @transform_1(%arg0: i32, %arg1: i32, %arg2: i32) -> (i32, i32, i32) {
    %c0_i32 = arith.constant 0 : i32
    %c0_i32_0 = arith.constant 0 : i32
    return %arg0, %arg2, %c0_i32 : i32, i32, i32
  }
  func.func @transform_2(%arg0: i32, %arg1: i32, %arg2: i32) -> (i32, i32, i32) {
    %c0_i32 = arith.constant 0 : i32
    %c0_i32_0 = arith.constant 0 : i32
    return %arg0, %c0_i32, %arg2 : i32, i32, i32
  }
  func.func @transform_3(%arg0: i32, %arg1: i32, %arg2: i32) -> (i32, i32) {
    %c0_i32 = arith.constant 0 : i32
    %c0_i32_0 = arith.constant 0 : i32
    %c0_i32_1 = arith.constant 0 : i32
    return %c0_i32, %c0_i32_0 : i32, i32
  }
  func.func @transform_4(%arg0: i32, %arg1: i32, %arg2: i32) -> (i32, i32, i32) {
    %c0_i32 = arith.constant 0 : i32
    %c0_i32_0 = arith.constant 0 : i32
    return %arg0, %c0_i32, %arg1 : i32, i32, i32
  }
}

</mosaic_0001>

<llo_original>
// kernel: tpu_custom_call.1
$region0: #{tpu_custom_call.1}
  #allocation0 [shape = 'u32[]', space=smem, size = 0x4, offset = 0x4, fixed_abs, tag = 'smem constant byte address 0x4 - core index']
  #allocation1 [shape = 'u32[144,128]{1,0:T(1,128)}', space=vmem, size = 0x12000, scoped, tag = 'internal scratch']
  #allocation2 [shape = 'bf16[40,256]{1,0:T(8,128)(2,1)}', space=vmem, size = 0x5000, scoped, tag = 'scratch operand']
  #allocation3 [shape = 'f32[1,256]{1,0:T(1,128)}', space=vmem, size = 0x400, scoped, tag = 'scratch operand']
  #allocation4 [shape = 'f32[1,256]{1,0:T(1,128)}', space=vmem, size = 0x400, scoped, tag = 'scratch operand']
  #allocation5 [shape = 'f32[32,256]{1,0:T(8,128)}', space=vmem, size = 0x8000, scoped, tag = 'scratch operand']
  #allocation6 [shape = 'f32[1,1]{1,0:T(1,128)S(6)}', space=smem, size = 0x200, scoped, tag = 'scoped memory for tpu_custom_call.1']
  %s0 = inlined_call_operand.vmem [shape: f32[2,32,512], index: 0, kind: input, shape index: {}]
  %s1 = inlined_call_operand.vmem [shape: bf16[2,512,40], index: 1, kind: input, shape index: {}]
  %s2 = inlined_call_operand.vmem [shape: bf16[2,32,512], index: 2, kind: input, shape index: {}]
  %s3 = inlined_call_operand.<no memory space> [shape: f32[1,1], index: 3, kind: input, shape index: {}]
  %s4 = inlined_call_operand.hbm [shape: f32[2,32,512], index: 4, kind: output, shape index: {}]
  %s5 = sld [smem:[#allocation0]]
  $region118: #{tpu_custom_call.1} parent=0
    _
  %s7 = ssub.s32 1, %s5
  %s8 = scalar_select 0, %s7, %s5
  %9 = sst [smem:[#allocation6]] %s3
  $region1: #{tpu_custom_call.1} parent=0
    #allocation7 [shape = 'u8[65536]{0}', space=vmem, size = 0x10000, scoped, tag = 'input window, operand 0']
    #allocation8 [shape = 'u8[32768]{0}', space=vmem, size = 0x8000, scoped, tag = 'input window, operand 2']
    #allocation9 [shape = 'u8[65536]{0}', space=vmem, size = 0x10000, scoped, tag = 'output window, operand 0']
    #allocation10 [shape = 's32[2]{0}', space=sflag, size = 0x8, scoped, tag = 'scoped memory for tpu_custom_call.1']
    %10 = vsyncpa [#allocation10], 0
    %s11 = scalar_lea.sflag [#allocation10], 1
    %12 = vsyncpa %s11, 0
    loop: start=0, step=1, limit=10
    $region2: #{tpu_custom_call.1} parent=1 // loop_pre_header
      _
    $region3: #{tpu_custom_call.1} parent=1 // loop_header
      %s14 = sphi 0, %s18
      %p15 = scmp.ge.s32.totalorder %s14, 10
      %s21 = sphi 0, %s40
      %s22 = sphi 0, %s36
      %s23 = sphi 0, %s32
      %s24 = sphi 0, %s21
      %s25 = sphi 0, %s22
      %s26 = sphi 0, %s23
      %s27 = sphi 0, %s24
      %s28 = sphi 0, %s25
      %s29 = sphi 0, %s26
      %s45 = sphi 0, %s47
      %s48 = sphi 0, %s45
      %s49 = sphi 0, %s48
      %s65 = sphi 0, %s49
      %s73 = sphi 0, %s75
      %s76 = sphi 0, %s73
      %s77 = sphi 0, %s76
      %s93 = sphi 0, %s77
      %s101 = sphi 0, %s103
      %s104 = sphi 0, %s101
      %s105 = sphi 0, %s104
      %s121 = sphi 0, %s105
      %s125 = sphi 0, %s125
      %s127 = sphi 0, %s125
      %s128 = sphi 0, %s127
      %s142 = sphi 0, %s128
      %s150 = sphi 0, %s152
      %s153 = sphi 0, %s150
      %s154 = sphi 0, %s153
      %s170 = sphi 0, %s154
    $region4: #{tpu_custom_call.1} parent=1 // loop_header_branch
      %17 = sbr.rel (%p15) target = $region8
    $region5: #{tpu_custom_call.1} parent=1 // loop_body
      %s19 = ssub.s32 %s14, 1
      %s20 = ssub.s32 %s14, 2
      %s30 = sadd.s32 1, %s23
      %p31 = scmp.ge.s32.totalorder %s30, 2
      %s32 = scalar_select %p31, 0, %s30
      %s33 = sadd.s32 1, %s22
      %s34 = scalar_select %p31, %s33, %s22
      %p35 = scmp.ge.s32.totalorder %s34, 2
      %s36 = scalar_select %p35, 0, %s34
      %s37 = sadd.s32 1, %s21
      %s38 = scalar_select %p35, %s37, %s21
      %p39 = scmp.ge.s32.totalorder %s38, 2
      %s40 = scalar_select %p39, 0, %s38
      %s41 = ssub.s32 %s21, %s40
      %s42 = ssub.s32 %s22, %s36
      %s43 = sor.u32 %s41, %s42
      %p44 = scmp.eq.s32.totalorder %s43, 0
      %s46 = sadd.s32 %s45, 1
      %s47 = scalar_select %p44, %s45, %s46
      %p50 = pneg %p44
      %p51 = scmp.eq.s32.totalorder %s14, 7
      %p52 = por %p50, %p51
      %p53 = scmp.ne.s32.totalorder %s45, %s48
      %p54 = scmp.eq.s32.totalorder %s14, 0
      %p55 = por %p53, %p54
      %p56 = scmp.ne.s32.totalorder %s45, %s48
      %p57 = scmp.eq.s32.totalorder %s19, 7
      %p58 = por %p56, %p57
      %p59 = scmp.ne.s32.totalorder %s48, %s49
      %p60 = scmp.eq.s32.totalorder %s19, 0
      %p61 = por %p59, %p60
      %p62 = scmp.ne.s32.totalorder %s48, %s49
      %p63 = scmp.eq.s32.totalorder %s20, 7
      %p64 = por %p62, %p63
      %p66 = scmp.ne.s32.totalorder %s49, %s65
      %p67 = scmp.eq.s32.totalorder %s20, 0
      %p68 = por %p66, %p67
      %s69 = ssub.s32 %s21, %s40
      %s70 = ssub.s32 %s23, %s32
      %s71 = sor.u32 %s69, %s70
      %p72 = scmp.eq.s32.totalorder %s71, 0
      %s74 = sadd.s32 %s73, 1
      %s75 = scalar_select %p72, %s73, %s74
      %p78 = pneg %p72
      %p79 = scmp.eq.s32.totalorder %s14, 7
      %p80 = por %p78, %p79
      %p81 = scmp.ne.s32.totalorder %s73, %s76
      %p82 = scmp.eq.s32.totalorder %s14, 0
      %p83 = por %p81, %p82
      %p84 = scmp.ne.s32.totalorder %s73, %s76
      %p85 = scmp.eq.s32.totalorder %s19, 7
      %p86 = por %p84, %p85
      %p87 = scmp.ne.s32.totalorder %s76, %s77
      %p88 = scmp.eq.s32.totalorder %s19, 0
      %p89 = por %p87, %p88
      %p90 = scmp.ne.s32.totalorder %s76, %s77
      %p91 = scmp.eq.s32.totalorder %s20, 7
      %p92 = por %p90, %p91
      %p94 = scmp.ne.s32.totalorder %s77, %s93
      %p95 = scmp.eq.s32.totalorder %s20, 0
      %p96 = por %p94, %p95
      %s97 = ssub.s32 %s21, %s40
      %s98 = ssub.s32 %s23, %s32
      %s99 = sor.u32 %s97, %s98
      %p100 = scmp.eq.s32.totalorder %s99, 0
      %s102 = sadd.s32 %s101, 1
      %s103 = scalar_select %p100, %s101, %s102
      %p106 = pneg %p100
      %p107 = scmp.eq.s32.totalorder %s14, 7
      %p108 = por %p106, %p107
      %p109 = scmp.ne.s32.totalorder %s101, %s104
      %p110 = scmp.eq.s32.totalorder %s14, 0
      %p111 = por %p109, %p110
      %p112 = scmp.ne.s32.totalorder %s101, %s104
      %p113 = scmp.eq.s32.totalorder %s19, 7
      %p114 = por %p112, %p113
      %p115 = scmp.ne.s32.totalorder %s104, %s105
      %p116 = scmp.eq.s32.totalorder %s19, 0
      %p117 = por %p115, %p116
      %p118 = scmp.ne.s32.totalorder %s104, %s105
      %p119 = scmp.eq.s32.totalorder %s20, 7
      %p120 = por %p118, %p119
      %p122 = scmp.ne.s32.totalorder %s105, %s121
      %p123 = scmp.eq.s32.totalorder %s20, 0
      %p124 = por %p122, %p123
      %s126 = sadd.s32 %s125, 1
      %p129 = scmp.eq.s32.totalorder %s14, 7
      %p130 = scmp.ne.s32.totalorder %s125, %s127
      %p131 = scmp.eq.s32.totalorder %s14, 0
      %p132 = por %p130, %p131
      %p133 = scmp.ne.s32.totalorder %s125, %s127
      %p134 = scmp.eq.s32.totalorder %s19, 7
      %p135 = por %p133, %p134
      %p136 = scmp.ne.s32.totalorder %s127, %s128
      %p137 = scmp.eq.s32.totalorder %s19, 0
      %p138 = por %p136, %p137
      %p139 = scmp.ne.s32.totalorder %s127, %s128
      %p140 = scmp.eq.s32.totalorder %s20, 7
      %p141 = por %p139, %p140
      %p143 = scmp.ne.s32.totalorder %s128, %s142
      %p144 = scmp.eq.s32.totalorder %s20, 0
      %p145 = por %p143, %p144
      %s146 = ssub.s32 %s21, %s40
      %s147 = ssub.s32 %s22, %s36
      %s148 = sor.u32 %s146, %s147
      %p149 = scmp.eq.s32.totalorder %s148, 0
      %s151 = sadd.s32 %s150, 1
      %s152 = scalar_select %p149, %s150, %s151
      %p155 = pneg %p149
      %p156 = scmp.eq.s32.totalorder %s14, 7
      %p157 = por %p155, %p156
      %p158 = scmp.ne.s32.totalorder %s150, %s153
      %p159 = scmp.eq.s32.totalorder %s14, 0
      %p160 = por %p158, %p159
      %p161 = scmp.ne.s32.totalorder %s150, %s153
      %p162 = scmp.eq.s32.totalorder %s19, 7
      %p163 = por %p161, %p162
      %p164 = scmp.ne.s32.totalorder %s153, %s154
      %p165 = scmp.eq.s32.totalorder %s19, 0
      %p166 = por %p164, %p165
      %p167 = scmp.ne.s32.totalorder %s153, %s154
      %p168 = scmp.eq.s32.totalorder %s20, 7
      %p169 = por %p167, %p168
      %p171 = scmp.ne.s32.totalorder %s154, %s170
      %p172 = scmp.eq.s32.totalorder %s20, 0
      %p173 = por %p171, %p172
      %p174 = scmp.le.s32.totalorder 1, %s14
      %p175 = scmp.lt.s32.totalorder %s14, 9
      %p176 = pnand %p174, %p175
      %p177 = pneg %p176
      // Predicated region
      $region9: #{tpu_custom_call.1} parent=5 // pred_check
        _
      $region10: #{tpu_custom_call.1} parent=5 // pred_check_branch
        %179 = sbr.rel (%p176) target = $region12
      $region11: #{tpu_custom_call.1} parent=5 // pred_region
        %s180 = ssub.s32 %s14, 1
        // Predicated region
        $region13: #{tpu_custom_call.1} parent=11 // pred_check
          %p181 = pneg %p138
        $region14: #{tpu_custom_call.1} parent=11 // pred_check_branch
          %183 = sbr.rel (%p181) target = $region16
        $region15: #{tpu_custom_call.1} parent=11 // pred_region
          _
        $region16: #{tpu_custom_call.1} parent=11 // pred_fallthru
          _
      $region12: #{tpu_custom_call.1} parent=5 // pred_fallthru
        _
      %p184 = scmp.lt.s32.totalorder %s14, 8
      // Predicated region
      $region17: #{tpu_custom_call.1} parent=5 // pred_check
        %p185 = pneg %p184
      $region18: #{tpu_custom_call.1} parent=5 // pred_check_branch
        %187 = sbr.rel (%p185) target = $region20
      $region19: #{tpu_custom_call.1} parent=5 // pred_region
        // Predicated region
        $region21: #{tpu_custom_call.1} parent=19 // pred_check
          %p188 = pneg %p55
        $region22: #{tpu_custom_call.1} parent=19 // pred_check_branch
          %190 = sbr.rel (%p188) target = $region24
        $region23: #{tpu_custom_call.1} parent=19 // pred_region
          %s191 = sand.u32 %s45, 1
          %s192 = sand.u32 %s45, 1
          %s193 = smul.addr %s192, 64
          %s194 = scalar_lea.vmem [#allocation7], %s193
          %s195 = smul.u32 2, %s22
          %s196 = smul.addr %s21, 16
          %s197 = sadd.s32 %s195, %s196
          %s198 = smul.addr %s197, 8
          %s199 = scalar_lea.vmem %s0, %s198
          // Predicated region
          $region25: #{tpu_custom_call.1} parent=23 // pred_check
            _
          $region26: #{tpu_custom_call.1} parent=23 // pred_check_branch
            %201 = sbr.rel (0) target = $region28
          $region27: #{tpu_custom_call.1} parent=23 // pred_region
            // Predicated region
            $region29: #{tpu_custom_call.1} parent=27 // pred_check
              _
            $region30: #{tpu_custom_call.1} parent=27 // pred_check_branch
              %203 = sbr.rel (0) target = $region32
            $region31: #{tpu_custom_call.1} parent=27 // pred_region
              loop: start=0, step=1, limit=1
              $region33: #{tpu_custom_call.1} parent=31 // loop_pre_header
                _
              $region34: #{tpu_custom_call.1} parent=31 // loop_header
                %s205 = sphi 0, %s209
                %p206 = scmp.ge.s32.totalorder %s205, 1
                %s210 = sphi %s199, %s199
                %s211 = sphi %s194, %s194
              $region35: #{tpu_custom_call.1} parent=31 // loop_header_branch
                %208 = sbr.rel (%p206) target = $region39
              $region36: #{tpu_custom_call.1} parent=31 // loop_body
                %v212 = vld [vmem:[%s210] sm:$0xff]
                %213 = vst [vmem:[%s211] sm:$0xff] %v212
                %v214 = vld [vmem:[%s210 + $0x8] sm:$0xff]
                %215 = vst [vmem:[%s211 + $0x8] sm:$0xff] %v214
                %v216 = vld [vmem:[%s210 + $0x20] sm:$0xff]
                %217 = vst [vmem:[%s211 + $0x10] sm:$0xff] %v216
                %v218 = vld [vmem:[%s210 + $0x28] sm:$0xff]
                %219 = vst [vmem:[%s211 + $0x18] sm:$0xff] %v218
                %v220 = vld [vmem:[%s210 + $0x40] sm:$0xff]
                %221 = vst [vmem:[%s211 + $0x20] sm:$0xff] %v220
                %v222 = vld [vmem:[%s210 + $0x48] sm:$0xff]
                %223 = vst [vmem:[%s211 + $0x28] sm:$0xff] %v222
                %v224 = vld [vmem:[%s210 + $0x60] sm:$0xff]
                %225 = vst [vmem:[%s211 + $0x30] sm:$0xff] %v224
                %v226 = vld [vmem:[%s210 + $0x68] sm:$0xff]
                %227 = vst [vmem:[%s211 + $0x38] sm:$0xff] %v226
              $region37: #{tpu_custom_call.1} parent=31 // loop_footer
                %s209 = sadd.s32 1, %s205
              $region38: #{tpu_custom_call.1} parent=31 // loop_footer_branch
                %204 = sbr.rel target = $region34
              $region39: #{tpu_custom_call.1} parent=31 // loop_exit
                _
            $region32: #{tpu_custom_call.1} parent=27 // pred_fallthru
              _
            // Predicated region
            $region40: #{tpu_custom_call.1} parent=27 // pred_check
              _
            $region41: #{tpu_custom_call.1} parent=27 // pred_check_branch
              %229 = sbr.rel target = $region43
            $region42: #{tpu_custom_call.1} parent=27 // pred_region
              _
            $region43: #{tpu_custom_call.1} parent=27 // pred_fallthru
              _
          $region28: #{tpu_custom_call.1} parent=23 // pred_fallthru
            _
          %230 = vnop
        $region24: #{tpu_custom_call.1} parent=19 // pred_fallthru
          _
        // Predicated region
        $region44: #{tpu_custom_call.1} parent=19 // pred_check
          %p231 = pneg %p83
        $region45: #{tpu_custom_call.1} parent=19 // pred_check_branch
          %233 = sbr.rel (%p231) target = $region47
        $region46: #{tpu_custom_call.1} parent=19 // pred_region
          %s234 = smul.u32 32, %s23
          %p235 = scmp.lt.s32.totalorder %s21, 1
          %s236 = scalar_select %p235, %s21, 1
          %p237 = scmp.lt.s32.totalorder %s234, 63
          %s238 = scalar_select %p237, %s234, 63
          %s239 = smul.addr %s236, 64
          %s240 = sadd.s32 %s238, %s239
          %s241 = smul.addr %s240, 4
          %s242 = scalar_lea.vmem %s1, %s241
          %s243 = smul.u32 32, %s23
        $region47: #{tpu_custom_call.1} parent=19 // pred_fallthru
          _
        // Predicated region
        $region48: #{tpu_custom_call.1} parent=19 // pred_check
          %p244 = pneg %p111
        $region49: #{tpu_custom_call.1} parent=19 // pred_check_branch
          %246 = sbr.rel (%p244) target = $region51
        $region50: #{tpu_custom_call.1} parent=19 // pred_region
          %s247 = sand.u32 %s101, 1
          %s248 = sand.u32 %s101, 1
          %s249 = smul.addr %s248, 32
          %s250 = scalar_lea.vmem [#allocation8], %s249
          %s251 = smul.u32 2, %s23
          %s252 = smul.addr %s21, 16
          %s253 = sadd.s32 %s251, %s252
          %s254 = smul.addr %s253, 4
          %s255 = scalar_lea.vmem %s2, %s254
          // Predicated region
          $region52: #{tpu_custom_call.1} parent=50 // pred_check
            _
          $region53: #{tpu_custom_call.1} parent=50 // pred_check_branch
            %257 = sbr.rel (0) target = $region55
          $region54: #{tpu_custom_call.1} parent=50 // pred_region
            // Predicated region
            $region56: #{tpu_custom_call.1} parent=54 // pred_check
              _
            $region57: #{tpu_custom_call.1} parent=54 // pred_check_branch
              %259 = sbr.rel (0) target = $region59
            $region58: #{tpu_custom_call.1} parent=54 // pred_region
              // Predicated region
              $region71: #{tpu_custom_call.1} parent=58 // pred_check
                _
              $region72: #{tpu_custom_call.1} parent=58 // pred_check_branch
                %280 = sbr.rel (0) target = $region74
              $region73: #{tpu_custom_call.1} parent=58 // pred_region
                loop: start=0, step=1, limit=1
                $region75: #{tpu_custom_call.1} parent=73 // loop_pre_header
                  _
                $region76: #{tpu_custom_call.1} parent=73 // loop_header
                  %s282 = sphi 0, %s286
                  %p283 = scmp.ge.s32.totalorder %s282, 1
                  %s287 = sphi %s255, %s255
                  %s288 = sphi %s250, %s250
                $region77: #{tpu_custom_call.1} parent=73 // loop_header_branch
                  %285 = sbr.rel (%p283) target = $region81
                $region78: #{tpu_custom_call.1} parent=73 // loop_body
                  %v289 = vld [vmem:[%s287] sm:$0xff]
                  %290 = vst [vmem:[%s288] sm:$0xff] %v289
                  %v291 = vld [vmem:[%s287 + $0x10] sm:$0xff]
                  %292 = vst [vmem:[%s288 + $0x8] sm:$0xff] %v291
                  %v293 = vld [vmem:[%s287 + $0x20] sm:$0xff]
                  %294 = vst [vmem:[%s288 + $0x10] sm:$0xff] %v293
                  %v295 = vld [vmem:[%s287 + $0x30] sm:$0xff]
                  %296 = vst [vmem:[%s288 + $0x18] sm:$0xff] %v295
                $region79: #{tpu_custom_call.1} parent=73 // loop_footer
                  %s286 = sadd.s32 1, %s282
                $region80: #{tpu_custom_call.1} parent=73 // loop_footer_branch
                  %281 = sbr.rel target = $region76
                $region81: #{tpu_custom_call.1} parent=73 // loop_exit
                  _
              $region74: #{tpu_custom_call.1} parent=58 // pred_fallthru
                _
              // Predicated region
              $region82: #{tpu_custom_call.1} parent=58 // pred_check
                _
              $region83: #{tpu_custom_call.1} parent=58 // pred_check_branch
                %298 = sbr.rel target = $region85
              $region84: #{tpu_custom_call.1} parent=58 // pred_region
                _
              $region85: #{tpu_custom_call.1} parent=58 // pred_fallthru
                _
            $region59: #{tpu_custom_call.1} parent=54 // pred_fallthru
              _
            // Predicated region
            $region60: #{tpu_custom_call.1} parent=54 // pred_check
              _
            $region61: #{tpu_custom_call.1} parent=54 // pred_check_branch
              %261 = sbr.rel target = $region63
            $region62: #{tpu_custom_call.1} parent=54 // pred_region
              loop: start=0, step=1, limit=1
              $region64: #{tpu_custom_call.1} parent=62 // loop_pre_header
                _
              $region65: #{tpu_custom_call.1} parent=62 // loop_header
                %s264 = sphi 0, %s268
                %p265 = scmp.ge.s32.totalorder %s264, 1
                %s269 = sphi %s255, %s255
                %s270 = sphi %s250, %s250
              $region66: #{tpu_custom_call.1} parent=62 // loop_header_branch
                %267 = sbr.rel (%p265) target = $region70
              $region67: #{tpu_custom_call.1} parent=62 // loop_body
                %v271 = vld [vmem:[%s269] sm:$0xff]
                %272 = vst [vmem:[%s270] sm:$0xff] %v271
                %v273 = vld [vmem:[%s269 + $0x10] sm:$0xff]
                %274 = vst [vmem:[%s270 + $0x8] sm:$0xff] %v273
                %v275 = vld [vmem:[%s269 + $0x20] sm:$0xff]
                %276 = vst [vmem:[%s270 + $0x10] sm:$0xff] %v275
                %v277 = vld [vmem:[%s269 + $0x30] sm:$0xff]
                %278 = vst [vmem:[%s270 + $0x18] sm:$0xff] %v277
              $region68: #{tpu_custom_call.1} parent=62 // loop_footer
                %s268 = sadd.s32 1, %s264
              $region69: #{tpu_custom_call.1} parent=62 // loop_footer_branch
                %263 = sbr.rel target = $region65
              $region70: #{tpu_custom_call.1} parent=62 // loop_exit
                _
            $region63: #{tpu_custom_call.1} parent=54 // pred_fallthru
              _
          $region55: #{tpu_custom_call.1} parent=50 // pred_fallthru
            _
          %299 = vnop
        $region51: #{tpu_custom_call.1} parent=19 // pred_fallthru
          _
      $region20: #{tpu_custom_call.1} parent=5 // pred_fallthru
        _
      %p300 = scmp.le.s32.totalorder 1, %s14
      %p301 = scmp.lt.s32.totalorder %s14, 9
      %p302 = pnand %p300, %p301
      %p303 = pneg %p302
      // Predicated region
      $region86: #{tpu_custom_call.1} parent=5 // pred_check
        _
      $region87: #{tpu_custom_call.1} parent=5 // pred_check_branch
        %305 = sbr.rel (%p302) target = $region89
      $region88: #{tpu_custom_call.1} parent=5 // pred_region
        %s306 = ssub.s32 %s14, 1
        %s307 = sand.u32 %s48, 1
        %s308 = sand.u32 %s48, 1
        %s309 = smul.addr %s308, 64
        %s310 = scalar_lea.vmem [#allocation7], %s309
        // Predicated region
        $region90: #{tpu_custom_call.1} parent=88 // pred_check
          %p311 = pneg %p61
        $region91: #{tpu_custom_call.1} parent=88 // pred_check_branch
          %313 = sbr.rel (%p311) target = $region93
        $region92: #{tpu_custom_call.1} parent=88 // pred_region
          _
        $region93: #{tpu_custom_call.1} parent=88 // pred_fallthru
          _
        %s314 = sand.u32 %s104, 1
        %s315 = sand.u32 %s104, 1
        %s316 = smul.addr %s315, 32
        %s317 = scalar_lea.vmem [#allocation8], %s316
        // Predicated region
        $region94: #{tpu_custom_call.1} parent=88 // pred_check
          %p318 = pneg %p117
        $region95: #{tpu_custom_call.1} parent=88 // pred_check_branch
          %320 = sbr.rel (%p318) target = $region97
        $region96: #{tpu_custom_call.1} parent=88 // pred_region
          _
        $region97: #{tpu_custom_call.1} parent=88 // pred_fallthru
          _
        %s321 = sand.u32 %s48, 1
        %s322 = sand.u32 %s48, 1
        %s323 = smul.addr %s322, 64
        %s324 = scalar_lea.vmem [#allocation7], %s323
        %p325 = pneg %p61
        %p326 = pneg %p58
        %s327 = smul.u32 32, %s26
        %p328 = scmp.lt.s32.totalorder %s24, 1
        %s329 = scalar_select %p328, %s24, 1
        %p330 = scmp.lt.s32.totalorder %s327, 63
        %s331 = scalar_select %p330, %s327, 63
        %s332 = smul.addr %s329, 64
        %s333 = sadd.s32 %s331, %s332
        %s334 = smul.addr %s333, 4
        %s335 = scalar_lea.vmem %s1, %s334
        %p336 = pneg %p89
        %p337 = pneg %p86
        %s338 = sand.u32 %s104, 1
        %s339 = sand.u32 %s104, 1
        %s340 = smul.addr %s339, 32
        %s341 = scalar_lea.vmem [#allocation8], %s340
        %p342 = pneg %p117
        %p343 = pneg %p114
        %p344 = pneg %p138
        %p345 = pneg %p135
        %p346 = pneg %p166
        %p347 = pneg %p163
        %s348 = sand.u32 %s153, 1
        %s349 = scalar_lea.sflag [#allocation10], %s348
        %s350 = sand.u32 %s153, 1
        %s351 = smul.addr %s350, 64
        %s352 = scalar_lea.vmem [#allocation9], %s351
        %s353 = smul.u32 2, %s25
        %s354 = smul.u32 32, %s26
        %p355 = scmp.lt.s32.totalorder %s24, 1
        %s356 = scalar_select %p355, %s24, 1
        %p357 = scmp.lt.s32.totalorder %s354, 63
        %s358 = scalar_select %p357, %s354, 63
        %s359 = smul.addr %s356, 64
        %s360 = sadd.s32 %s358, %s359
        %s361 = smul.addr %s360, 4
        %s362 = scalar_lea.vmem %s1, %s361
        %s363 = smul.u32 32, %s26
        %s364 = smul.u32 2, %s26
        %s365 = smul.u32 2, %s25
        %p368 = scmp.eq.s32.totalorder %s26, 0
        // Predicated region
        $region98: #{tpu_custom_call.1} parent=88 // pred_check
          %p369 = pneg %p368
        $region99: #{tpu_custom_call.1} parent=88 // pred_check_branch
          %371 = sbr.rel (%p369) target = $region101
        $region100: #{tpu_custom_call.1} parent=88 // pred_region
          %v372 = vlaneseq
          %vm373 = vcmp.ge.s32.totalorder %v372, 0
          %vm374 = vcmp.lt.s32.totalorder %v372, 256
          %vm375 = vmand %vm373, %vm374
          %376 = vst.msk [vmem:[#allocation3] sm:$0x3] %vm375, -inf
          %377 = vst.msk [vmem:[#allocation4] sm:$0x3] %vm375, 0.0
          %378 = vst [vmem:[#allocation5] sm:$0xff] 0.0
          %379 = vst [vmem:[#allocation5 + $0x8] sm:$0xff] 0.0
          %380 = vst [vmem:[#allocation5 + $0x10] sm:$0xff] 0.0
          %381 = vst [vmem:[#allocation5 + $0x18] sm:$0xff] 0.0
          %382 = vst [vmem:[#allocation5 + $0x20] sm:$0xff] 0.0
          %383 = vst [vmem:[#allocation5 + $0x28] sm:$0xff] 0.0
          %384 = vst [vmem:[#allocation5 + $0x30] sm:$0xff] 0.0
          %385 = vst [vmem:[#allocation5 + $0x38] sm:$0xff] 0.0
          %v386 = vld [vmem:[%s310] sm:$0xff]
          %v387 = vld [vmem:[%s310 + $0x8] sm:$0xff]
          %v388 = vld [vmem:[%s310 + $0x10] sm:$0xff]
          %v389 = vld [vmem:[%s310 + $0x18] sm:$0xff]
          %v390 = vld [vmem:[%s310 + $0x20] sm:$0xff]
          %v391 = vld [vmem:[%s310 + $0x28] sm:$0xff]
          %v392 = vld [vmem:[%s310 + $0x30] sm:$0xff]
          %v393 = vld [vmem:[%s310 + $0x38] sm:$0xff]
          %v394 = vpack.c.bf16 %v388, %v386
          %v395 = vpack.c.bf16 %v389, %v387
          %v396 = vpack.c.bf16 %v392, %v390
          %v397 = vpack.c.bf16 %v393, %v391
          %v402 = vunpack.c.l.b16 %v394
          %v403 = vunpack.c.l.b16 %v395
          %v404 = vunpack.c.h.b16 %v394
          %v405 = vunpack.c.h.b16 %v395
          %v406 = vunpack.c.l.b16 %v396
          %v407 = vunpack.c.l.b16 %v397
          %v408 = vunpack.c.h.b16 %v396
          %v409 = vunpack.c.h.b16 %v397
          %v410 = vpack.c.b16 %v403, %v402
          %v411 = vpack.c.b16 %v405, %v404
          %v412 = vpack.c.b16 %v407, %v406
          %v413 = vpack.c.b16 %v409, %v408
          %418 = vst [vmem:[#allocation2] sm:$0xff] %v410
          %419 = vst [vmem:[#allocation2 + $0x8] sm:$0xff] %v411
          %420 = vst [vmem:[#allocation2 + $0x10] sm:$0xff] %v412
          %421 = vst [vmem:[#allocation2 + $0x18] sm:$0xff] %v413
          %422 = vst [vmem:[#allocation2 + $0x20] sm:$0xff] 1065369472
        $region101: #{tpu_custom_call.1} parent=88 // pred_fallthru
          _
        %v423 = vld [vmem:[%s362] sm:$0xf]
        %v424 = vld [vmem:[%s362 + $0x4] sm:$0xf]
        %v425 = vld [vmem:[%s362 + $0x8] sm:$0xf]
        %v426 = vld [vmem:[%s362 + $0xc] sm:$0xf]
        %v427 = vld [vmem:[%s362 + $0x10] sm:$0xf]
        %v428 = vld [vmem:[%s362 + $0x14] sm:$0xf]
        %v429 = vld [vmem:[%s362 + $0x18] sm:$0xf]
        %v430 = vld [vmem:[%s362 + $0x1c] sm:$0xf]
        %v431 = vld [vmem:[%s362 + $0x20] sm:$0xf]
        %v432 = vld [vmem:[%s362 + $0x24] sm:$0xf]
        %v433 = vld [vmem:[%s362 + $0x28] sm:$0xf]
        %v434 = vld [vmem:[%s362 + $0x2c] sm:$0xf]
        %v435 = vld [vmem:[%s362 + $0x30] sm:$0xf]
        %v436 = vld [vmem:[%s362 + $0x34] sm:$0xf]
        %v437 = vld [vmem:[%s362 + $0x38] sm:$0xf]
        %v438 = vld [vmem:[%s362 + $0x3c] sm:$0xf]
        %v439 = vld [vmem:[%s362 + $0x40] sm:$0xf]
        %v440 = vld [vmem:[%s362 + $0x44] sm:$0xf]
        %v441 = vld [vmem:[%s362 + $0x48] sm:$0xf]
        %v442 = vld [vmem:[%s362 + $0x4c] sm:$0xf]
        %v443 = vld [vmem:[%s362 + $0x50] sm:$0xf]
        %v444 = vld [vmem:[%s362 + $0x54] sm:$0xf]
        %v445 = vld [vmem:[%s362 + $0x58] sm:$0xf]
        %v446 = vld [vmem:[%s362 + $0x5c] sm:$0xf]
        %v447 = vld [vmem:[%s362 + $0x60] sm:$0xf]
        %v448 = vld [vmem:[%s362 + $0x64] sm:$0xf]
        %v449 = vld [vmem:[%s362 + $0x68] sm:$0xf]
        %v450 = vld [vmem:[%s362 + $0x6c] sm:$0xf]
        %v451 = vld [vmem:[%s362 + $0x70] sm:$0xf]
        %v452 = vld [vmem:[%s362 + $0x74] sm:$0xf]
        %v453 = vld [vmem:[%s362 + $0x78] sm:$0xf]
        %v454 = vld [vmem:[%s362 + $0x7c] sm:$0xf]
        %v455 = vld [vmem:[#allocation2] sm:$0xff]
        %v456 = vld [vmem:[#allocation2 + $0x8] sm:$0xff]
        %v457 = vld [vmem:[#allocation2 + $0x10] sm:$0xff]
        %v458 = vld [vmem:[#allocation2 + $0x18] sm:$0xff]
        %v459 = vld [vmem:[#allocation2 + $0x20] sm:$0xff]
        %v492 = vunpack.c.l.b16 %v423
        %v493 = vunpack.c.l.b16 %v424
        %v494 = vunpack.c.l.b16 %v425
        %v495 = vunpack.c.l.b16 %v426
        %v496 = vunpack.c.l.b16 %v427
        %v497 = vunpack.c.l.b16 %v428
        %v498 = vunpack.c.l.b16 %v429
        %v499 = vunpack.c.l.b16 %v430
        %v500 = vunpack.c.l.b16 %v431
        %v501 = vunpack.c.l.b16 %v432
        %v502 = vunpack.c.l.b16 %v433
        %v503 = vunpack.c.l.b16 %v434
        %v504 = vunpack.c.l.b16 %v435
        %v505 = vunpack.c.l.b16 %v436
        %v506 = vunpack.c.l.b16 %v437
        %v507 = vunpack.c.l.b16 %v438
        %v508 = vunpack.c.l.b16 %v439
        %v509 = vunpack.c.l.b16 %v440
        %v510 = vunpack.c.l.b16 %v441
        %v511 = vunpack.c.l.b16 %v442
        %v512 = vunpack.c.l.b16 %v443
        %v513 = vunpack.c.l.b16 %v444
        %v514 = vunpack.c.l.b16 %v445
        %v515 = vunpack.c.l.b16 %v446
        %v516 = vunpack.c.l.b16 %v447
        %v517 = vunpack.c.l.b16 %v448
        %v518 = vunpack.c.l.b16 %v449
        %v519 = vunpack.c.l.b16 %v450
        %v520 = vunpack.c.l.b16 %v451
        %v521 = vunpack.c.l.b16 %v452
        %v522 = vunpack.c.l.b16 %v453
        %v523 = vunpack.c.l.b16 %v454
        %v524 = vpack.c.b16 %v493, %v492
        %v525 = vpack.c.b16 %v495, %v494
        %v526 = vpack.c.b16 %v497, %v496
        %v527 = vpack.c.b16 %v499, %v498
        %v528 = vpack.c.b16 %v501, %v500
        %v529 = vpack.c.b16 %v503, %v502
        %v530 = vpack.c.b16 %v505, %v504
        %v531 = vpack.c.b16 %v507, %v506
        %v532 = vpack.c.b16 %v509, %v508
        %v533 = vpack.c.b16 %v511, %v510
        %v534 = vpack.c.b16 %v513, %v512
        %v535 = vpack.c.b16 %v515, %v514
        %v536 = vpack.c.b16 %v517, %v516
        %v537 = vpack.c.b16 %v519, %v518
        %v538 = vpack.c.b16 %v521, %v520
        %v539 = vpack.c.b16 %v523, %v522
        %v545 = vunpack.c.l.b16 %v455
        %v546 = vunpack.c.h.b16 %v455
        %v547 = vunpack.c.l.b16 %v456
        %v548 = vunpack.c.h.b16 %v456
        %v549 = vunpack.c.l.b16 %v457
        %v550 = vunpack.c.h.b16 %v457
        %v551 = vunpack.c.l.b16 %v458
        %v552 = vunpack.c.h.b16 %v458
        %v553 = vunpack.c.l.b16 %v459
        %v554 = vunpack.c.h.b16 %v459
        %v555 = vpack.c.b16 %v547, %v545
        %v556 = vpack.c.b16 %v548, %v546
        %v557 = vpack.c.b16 %v551, %v549
        %v558 = vpack.c.b16 %v552, %v550
        %v559 = vpack.c.b16 %v553, %v553
        %v560 = vpack.c.b16 %v554, %v554
        %vm565 = vcmask 326656
        %v567 = vsel %vm565, %v524, 0
        %v570 = vsel %vm565, %v525, 0
        %v573 = vsel %vm565, %v526, 0
        %v576 = vsel %vm565, %v527, 0
        %v579 = vsel %vm565, %v528, 0
        %v582 = vsel %vm565, %v529, 0
        %v585 = vsel %vm565, %v530, 0
        %v588 = vsel %vm565, %v531, 0
        %v591 = vsel %vm565, %v532, 0
        %v594 = vsel %vm565, %v533, 0
        %v597 = vsel %vm565, %v534, 0
        %v600 = vsel %vm565, %v535, 0
        %v603 = vsel %vm565, %v536, 0
        %v606 = vsel %vm565, %v537, 0
        %v609 = vsel %vm565, %v538, 0
        %v612 = vsel %vm565, %v539, 0
        %vm614 = vcmask 1043456
        %v616 = vsel %vm614, %v559, 0
        %v619 = vsel %vm614, %v560, 0
        %621 = vmatprep.subr.bf16.mxu0 %v556
        %622 = vmatpush1.bf16.msra.mxu0 %v555
        %623 = vmatprep.subr.bf16.mxu0 %v558
        %624 = vmatpush1.bf16.msra.mxu0 %v557
        %625 = vmatprep.subr.bf16.mxu0 %v619
        %626 = vmatpush1.bf16.msra.mxu0 %v616
        %627 = vmatprep.subr.bf16.mxu0 0
        %628 = vmatpush1.bf16.msra.mxu0 0
        %629 = vmatprep.subr.bf16.mxu0 0
        %630 = vmatpush1.bf16.msra.mxu0 0
        %631 = vmatprep.subr.bf16.mxu0 0
        %632 = vmatpush1.bf16.msra.mxu0 0
        %633 = vmatprep.subr.bf16.mxu0 0
        %634 = vmatpush1.bf16.msra.mxu0 0
        %635 = vmatprep.subr.bf16.mxu0 0
        %636 = vmatpush1.bf16.msra.mxu0 0
        %637 = vmatprep.subr.bf16.mxu0 0
        %638 = vmatpush1.bf16.msra.mxu0 0
        %639 = vmatprep.subr.bf16.mxu0 0
        %640 = vmatpush1.bf16.msra.mxu0 0
        %641 = vmatprep.subr.bf16.mxu0 0
        %642 = vmatpush1.bf16.msra.mxu0 0
        %643 = vmatprep.subr.bf16.mxu0 0
        %644 = vmatpush1.bf16.msra.mxu0 0
        %645 = vmatprep.subr.bf16.mxu0 0
        %646 = vmatpush1.bf16.msra.mxu0 0
        %647 = vmatprep.subr.bf16.mxu0 0
        %648 = vmatpush1.bf16.msra.mxu0 0
        %649 = vmatprep.subr.bf16.mxu0 0
        %650 = vmatpush1.bf16.msra.mxu0 0
        %651 = vmatprep.subr.bf16.mxu0 0
        %652 = vmatpush1.bf16.msra.mxu0 0
        %653 = vmatprep.mubr.bf16.mxu0 0
        %654 = vmatmul.mubr.bf16.gmra.mrb[0].mxu0 %v567
        %v655 = vpop.f32.mrb[0].mxu0
        %v656 = vadd.f32 0.0, %v655
        %v657 = vpop.f32.mrb[0].mxu0
        %v658 = vadd.f32 0.0, %v657
        %v659 = vpop.f32.mrb[0].mxu0
        %v660 = vadd.f32 0.0, %v659
        %v661 = vpop.f32.mrb[0].mxu0
        %v662 = vadd.f32 0.0, %v661
        %663 = vmatprep.mubr.bf16.mxu0 0
        %664 = vmatmul.mubr.bf16.gmra.mrb[0].mxu0 %v570
        %v665 = vpop.f32.mrb[0].mxu0
        %v666 = vadd.f32 0.0, %v665
        %v667 = vpop.f32.mrb[0].mxu0
        %v668 = vadd.f32 0.0, %v667
        %v669 = vpop.f32.mrb[0].mxu0
        %v670 = vadd.f32 0.0, %v669
        %v671 = vpop.f32.mrb[0].mxu0
        %v672 = vadd.f32 0.0, %v671
        %673 = vmatprep.mubr.bf16.mxu0 0
        %674 = vmatmul.mubr.bf16.gmra.mrb[0].mxu0 %v573
        %v675 = vpop.f32.mrb[0].mxu0
        %v676 = vadd.f32 0.0, %v675
        %v677 = vpop.f32.mrb[0].mxu0
        %v678 = vadd.f32 0.0, %v677
        %v679 = vpop.f32.mrb[0].mxu0
        %v680 = vadd.f32 0.0, %v679
        %v681 = vpop.f32.mrb[0].mxu0
        %v682 = vadd.f32 0.0, %v681
        %683 = vmatprep.mubr.bf16.mxu0 0
        %684 = vmatmul.mubr.bf16.gmra.mrb[0].mxu0 %v576
        %v685 = vpop.f32.mrb[0].mxu0
        %v686 = vadd.f32 0.0, %v685
        %v687 = vpop.f32.mrb[0].mxu0
        %v688 = vadd.f32 0.0, %v687
        %v689 = vpop.f32.mrb[0].mxu0
        %v690 = vadd.f32 0.0, %v689
        %v691 = vpop.f32.mrb[0].mxu0
        %v692 = vadd.f32 0.0, %v691
        %693 = vmatprep.mubr.bf16.mxu0 0
        %694 = vmatmul.mubr.bf16.gmra.mrb[0].mxu0 %v579
        %v695 = vpop.f32.mrb[0].mxu0
        %v696 = vadd.f32 0.0, %v695
        %v697 = vpop.f32.mrb[0].mxu0
        %v698 = vadd.f32 0.0, %v697
        %v699 = vpop.f32.mrb[0].mxu0
        %v700 = vadd.f32 0.0, %v699
        %v701 = vpop.f32.mrb[0].mxu0
        %v702 = vadd.f32 0.0, %v701
        %703 = vmatprep.mubr.bf16.mxu0 0
        %704 = vmatmul.mubr.bf16.gmra.mrb[0].mxu0 %v582
        %v705 = vpop.f32.mrb[0].mxu0
        %v706 = vadd.f32 0.0, %v705
        %v707 = vpop.f32.mrb[0].mxu0
        %v708 = vadd.f32 0.0, %v707
        %v709 = vpop.f32.mrb[0].mxu0
        %v710 = vadd.f32 0.0, %v709
        %v711 = vpop.f32.mrb[0].mxu0
        %v712 = vadd.f32 0.0, %v711
        %713 = vmatprep.mubr.bf16.mxu0 0
        %714 = vmatmul.mubr.bf16.gmra.mrb[0].mxu0 %v585
        %v715 = vpop.f32.mrb[0].mxu0
        %v716 = vadd.f32 0.0, %v715
        %v717 = vpop.f32.mrb[0].mxu0
        %v718 = vadd.f32 0.0, %v717
        %v719 = vpop.f32.mrb[0].mxu0
        %v720 = vadd.f32 0.0, %v719
        %v721 = vpop.f32.mrb[0].mxu0
        %v722 = vadd.f32 0.0, %v721
        %723 = vmatprep.mubr.bf16.mxu0 0
        %724 = vmatmul.mubr.bf16.gmra.mrb[0].mxu0 %v588
        %v725 = vpop.f32.mrb[0].mxu0
        %v726 = vadd.f32 0.0, %v725
        %v727 = vpop.f32.mrb[0].mxu0
        %v728 = vadd.f32 0.0, %v727
        %v729 = vpop.f32.mrb[0].mxu0
        %v730 = vadd.f32 0.0, %v729
        %v731 = vpop.f32.mrb[0].mxu0
        %v732 = vadd.f32 0.0, %v731
        %733 = vmatprep.mubr.bf16.mxu0 0
        %734 = vmatmul.mubr.bf16.gmra.mrb[0].mxu0 %v591
        %v735 = vpop.f32.mrb[0].mxu0
        %v736 = vadd.f32 0.0, %v735
        %v737 = vpop.f32.mrb[0].mxu0
        %v738 = vadd.f32 0.0, %v737
        %v739 = vpop.f32.mrb[0].mxu0
        %v740 = vadd.f32 0.0, %v739
        %v741 = vpop.f32.mrb[0].mxu0
        %v742 = vadd.f32 0.0, %v741
        %743 = vmatprep.mubr.bf16.mxu0 0
        %744 = vmatmul.mubr.bf16.gmra.mrb[0].mxu0 %v594
        %v745 = vpop.f32.mrb[0].mxu0
        %v746 = vadd.f32 0.0, %v745
        %v747 = vpop.f32.mrb[0].mxu0
        %v748 = vadd.f32 0.0, %v747
        %v749 = vpop.f32.mrb[0].mxu0
        %v750 = vadd.f32 0.0, %v749
        %v751 = vpop.f32.mrb[0].mxu0
        %v752 = vadd.f32 0.0, %v751
        %753 = vmatprep.mubr.bf16.mxu0 0
        %754 = vmatmul.mubr.bf16.gmra.mrb[0].mxu0 %v597
        %v755 = vpop.f32.mrb[0].mxu0
        %v756 = vadd.f32 0.0, %v755
        %v757 = vpop.f32.mrb[0].mxu0
        %v758 = vadd.f32 0.0, %v757
        %v759 = vpop.f32.mrb[0].mxu0
        %v760 = vadd.f32 0.0, %v759
        %v761 = vpop.f32.mrb[0].mxu0
        %v762 = vadd.f32 0.0, %v761
        %763 = vmatprep.mubr.bf16.mxu0 0
        %764 = vmatmul.mubr.bf16.gmra.mrb[0].mxu0 %v600
        %v765 = vpop.f32.mrb[0].mxu0
        %v766 = vadd.f32 0.0, %v765
        %v767 = vpop.f32.mrb[0].mxu0
        %v768 = vadd.f32 0.0, %v767
        %v769 = vpop.f32.mrb[0].mxu0
        %v770 = vadd.f32 0.0, %v769
        %v771 = vpop.f32.mrb[0].mxu0
        %v772 = vadd.f32 0.0, %v771
        %773 = vmatprep.mubr.bf16.mxu0 0
        %774 = vmatmul.mubr.bf16.gmra.mrb[0].mxu0 %v603
        %v775 = vpop.f32.mrb[0].mxu0
        %v776 = vadd.f32 0.0, %v775
        %v777 = vpop.f32.mrb[0].mxu0
        %v778 = vadd.f32 0.0, %v777
        %v779 = vpop.f32.mrb[0].mxu0
        %v780 = vadd.f32 0.0, %v779
        %v781 = vpop.f32.mrb[0].mxu0
        %v782 = vadd.f32 0.0, %v781
        %783 = vmatprep.mubr.bf16.mxu0 0
        %784 = vmatmul.mubr.bf16.gmra.mrb[0].mxu0 %v606
        %v785 = vpop.f32.mrb[0].mxu0
        %v786 = vadd.f32 0.0, %v785
        %v787 = vpop.f32.mrb[0].mxu0
        %v788 = vadd.f32 0.0, %v787
        %v789 = vpop.f32.mrb[0].mxu0
        %v790 = vadd.f32 0.0, %v789
        %v791 = vpop.f32.mrb[0].mxu0
        %v792 = vadd.f32 0.0, %v791
        %793 = vmatprep.mubr.bf16.mxu0 0
        %794 = vmatmul.mubr.bf16.gmra.mrb[0].mxu0 %v609
        %v795 = vpop.f32.mrb[0].mxu0
        %v796 = vadd.f32 0.0, %v795
        %v797 = vpop.f32.mrb[0].mxu0
        %v798 = vadd.f32 0.0, %v797
        %v799 = vpop.f32.mrb[0].mxu0
        %v800 = vadd.f32 0.0, %v799
        %v801 = vpop.f32.mrb[0].mxu0
        %v802 = vadd.f32 0.0, %v801
        %803 = vmatprep.mubr.bf16.mxu0 0
        %804 = vmatmul.mubr.bf16.gmra.mrb[0].mxu0 %v612
        %v805 = vpop.f32.mrb[0].mxu0
        %v806 = vadd.f32 0.0, %v805
        %v807 = vpop.f32.mrb[0].mxu0
        %v808 = vadd.f32 0.0, %v807
        %v809 = vpop.f32.mrb[0].mxu0
        %v810 = vadd.f32 0.0, %v809
        %v811 = vpop.f32.mrb[0].mxu0
        %v812 = vadd.f32 0.0, %v811
        %813 = vdwg.mxu0
        %s814 = smul.u32 %s26, 256
        %v815 = vlaneseq
        %v816 = vshrl.u32 %v815, 7
        %v817 = vadd.s32 %v816, 8
        %v818 = vadd.s32 %v816, 16
        %v819 = vadd.s32 %v816, 24
        %v820 = vadd.s32 %v816, 32
        %v821 = vadd.s32 %v816, 40
        %v822 = vadd.s32 %v816, 48
        %v823 = vadd.s32 %v816, 56
        %v824 = vadd.s32 %v816, 64
        %v825 = vadd.s32 %v816, 72
        %v826 = vadd.s32 %v816, 80
        %v827 = vadd.s32 %v816, 88
        %v828 = vadd.s32 %v816, 96
        %v829 = vadd.s32 %v816, 104
        %v830 = vadd.s32 %v816, 112
        %v831 = vadd.s32 %v816, 120
        %v832 = vadd.s32 %v816, 128
        %v833 = vadd.s32 %v816, 136
        %v834 = vadd.s32 %v816, 144
        %v835 = vadd.s32 %v816, 152
        %v836 = vadd.s32 %v816, 160
        %v837 = vadd.s32 %v816, 168
        %v838 = vadd.s32 %v816, 176
        %v839 = vadd.s32 %v816, 184
        %v840 = vadd.s32 %v816, 192
        %v841 = vadd.s32 %v816, 200
        %v842 = vadd.s32 %v816, 208
        %v843 = vadd.s32 %v816, 216
        %v844 = vadd.s32 %v816, 224
        %v845 = vadd.s32 %v816, 232
        %v846 = vadd.s32 %v816, 240
        %v847 = vadd.s32 %v816, 248
        %v848 = vstv %s814
        %v849 = vadd.s32 %v848, %v816
        %v850 = vadd.s32 %v848, %v817
        %v851 = vadd.s32 %v848, %v818
        %v852 = vadd.s32 %v848, %v819
        %v853 = vadd.s32 %v848, %v820
        %v854 = vadd.s32 %v848, %v821
        %v855 = vadd.s32 %v848, %v822
        %v856 = vadd.s32 %v848, %v823
        %v857 = vadd.s32 %v848, %v824
        %v858 = vadd.s32 %v848, %v825
        %v859 = vadd.s32 %v848, %v826
        %v860 = vadd.s32 %v848, %v827
        %v861 = vadd.s32 %v848, %v828
        %v862 = vadd.s32 %v848, %v829
        %v863 = vadd.s32 %v848, %v830
        %v864 = vadd.s32 %v848, %v831
        %v865 = vadd.s32 %v848, %v832
        %v866 = vadd.s32 %v848, %v833
        %v867 = vadd.s32 %v848, %v834
        %v868 = vadd.s32 %v848, %v835
        %v869 = vadd.s32 %v848, %v836
        %v870 = vadd.s32 %v848, %v837
        %v871 = vadd.s32 %v848, %v838
        %v872 = vadd.s32 %v848, %v839
        %v873 = vadd.s32 %v848, %v840
        %v874 = vadd.s32 %v848, %v841
        %v875 = vadd.s32 %v848, %v842
        %v876 = vadd.s32 %v848, %v843
        %v877 = vadd.s32 %v848, %v844
        %v878 = vadd.s32 %v848, %v845
        %v879 = vadd.s32 %v848, %v846
        %v880 = vadd.s32 %v848, %v847
        %vm881 = vcmp.lt.s32.totalorder %v849, 384
        %vm882 = vcmp.lt.s32.totalorder %v850, 384
        %vm883 = vcmp.lt.s32.totalorder %v851, 384
        %vm884 = vcmp.lt.s32.totalorder %v852, 384
        %vm885 = vcmp.lt.s32.totalorder %v853, 384
        %vm886 = vcmp.lt.s32.totalorder %v854, 384
        %vm887 = vcmp.lt.s32.totalorder %v855, 384
        %vm888 = vcmp.lt.s32.totalorder %v856, 384
        %vm889 = vcmp.lt.s32.totalorder %v857, 384
        %vm890 = vcmp.lt.s32.totalorder %v858, 384
        %vm891 = vcmp.lt.s32.totalorder %v859, 384
        %vm892 = vcmp.lt.s32.totalorder %v860, 384
        %vm893 = vcmp.lt.s32.totalorder %v861, 384
        %vm894 = vcmp.lt.s32.totalorder %v862, 384
        %vm895 = vcmp.lt.s32.totalorder %v863, 384
        %vm896 = vcmp.lt.s32.totalorder %v864, 384
        %vm897 = vcmp.lt.s32.totalorder %v865, 384
        %vm898 = vcmp.lt.s32.totalorder %v866, 384
        %vm899 = vcmp.lt.s32.totalorder %v867, 384
        %vm900 = vcmp.lt.s32.totalorder %v868, 384
        %vm901 = vcmp.lt.s32.totalorder %v869, 384
        %vm902 = vcmp.lt.s32.totalorder %v870, 384
        %vm903 = vcmp.lt.s32.totalorder %v871, 384
        %vm904 = vcmp.lt.s32.totalorder %v872, 384
        %vm905 = vcmp.lt.s32.totalorder %v873, 384
        %vm906 = vcmp.lt.s32.totalorder %v874, 384
        %vm907 = vcmp.lt.s32.totalorder %v875, 384
        %vm908 = vcmp.lt.s32.totalorder %v876, 384
        %vm909 = vcmp.lt.s32.totalorder %v877, 384
        %vm910 = vcmp.lt.s32.totalorder %v878, 384
        %vm911 = vcmp.lt.s32.totalorder %v879, 384
        %vm912 = vcmp.lt.s32.totalorder %v880, 384
        %v913 = vsel %vm881, %v656, -inf
        %v914 = vsel %vm881, %v658, -inf
        %v915 = vsel %vm882, %v660, -inf
        %v916 = vsel %vm882, %v662, -inf
        %v917 = vsel %vm883, %v666, -inf
        %v918 = vsel %vm883, %v668, -inf
        %v919 = vsel %vm884, %v670, -inf
        %v920 = vsel %vm884, %v672, -inf
        %v921 = vsel %vm885, %v676, -inf
        %v922 = vsel %vm885, %v678, -inf
        %v923 = vsel %vm886, %v680, -inf
        %v924 = vsel %vm886, %v682, -inf
        %v925 = vsel %vm887, %v686, -inf
        %v926 = vsel %vm887, %v688, -inf
        %v927 = vsel %vm888, %v690, -inf
        %v928 = vsel %vm888, %v692, -inf
        %v929 = vsel %vm889, %v696, -inf
        %v930 = vsel %vm889, %v698, -inf
        %v931 = vsel %vm890, %v700, -inf
        %v932 = vsel %vm890, %v702, -inf
        %v933 = vsel %vm891, %v706, -inf
        %v934 = vsel %vm891, %v708, -inf
        %v935 = vsel %vm892, %v710, -inf
        %v936 = vsel %vm892, %v712, -inf
        %v937 = vsel %vm893, %v716, -inf
        %v938 = vsel %vm893, %v718, -inf
        %v939 = vsel %vm894, %v720, -inf
        %v940 = vsel %vm894, %v722, -inf
        %v941 = vsel %vm895, %v726, -inf
        %v942 = vsel %vm895, %v728, -inf
        %v943 = vsel %vm896, %v730, -inf
        %v944 = vsel %vm896, %v732, -inf
        %v945 = vsel %vm897, %v736, -inf
        %v946 = vsel %vm897, %v738, -inf
        %v947 = vsel %vm898, %v740, -inf
        %v948 = vsel %vm898, %v742, -inf
        %v949 = vsel %vm899, %v746, -inf
        %v950 = vsel %vm899, %v748, -inf
        %v951 = vsel %vm900, %v750, -inf
        %v952 = vsel %vm900, %v752, -inf
        %v953 = vsel %vm901, %v756, -inf
        %v954 = vsel %vm901, %v758, -inf
        %v955 = vsel %vm902, %v760, -inf
        %v956 = vsel %vm902, %v762, -inf
        %v957 = vsel %vm903, %v766, -inf
        %v958 = vsel %vm903, %v768, -inf
        %v959 = vsel %vm904, %v770, -inf
        %v960 = vsel %vm904, %v772, -inf
        %v961 = vsel %vm905, %v776, -inf
        %v962 = vsel %vm905, %v778, -inf
        %v963 = vsel %vm906, %v780, -inf
        %v964 = vsel %vm906, %v782, -inf
        %v965 = vsel %vm907, %v786, -inf
        %v966 = vsel %vm907, %v788, -inf
        %v967 = vsel %vm908, %v790, -inf
        %v968 = vsel %vm908, %v792, -inf
        %v969 = vsel %vm909, %v796, -inf
        %v970 = vsel %vm909, %v798, -inf
        %v971 = vsel %vm910, %v800, -inf
        %v972 = vsel %vm910, %v802, -inf
        %v973 = vsel %vm911, %v806, -inf
        %v974 = vsel %vm911, %v808, -inf
        %v975 = vsel %vm912, %v810, -inf
        %v976 = vsel %vm912, %v812, -inf
        %v977 = vld [vmem:[#allocation3] sm:$0x3]
        %v978 = vmax.f32 %v913, %v917
        %v979 = vmax.f32 %v915, %v919
        %v980 = vmax.f32 %v978, %v921
        %v981 = vmax.f32 %v979, %v923
        %v982 = vmax.f32 %v980, %v925
        %v983 = vmax.f32 %v981, %v927
        %v984 = vmax.f32 %v982, %v929
        %v985 = vmax.f32 %v983, %v931
        %v986 = vmax.f32 %v984, %v933
        %v987 = vmax.f32 %v985, %v935
        %v988 = vmax.f32 %v986, %v937
        %v989 = vmax.f32 %v987, %v939
        %v990 = vmax.f32 %v988, %v941
        %v991 = vmax.f32 %v989, %v943
        %v992 = vmax.f32 %v990, %v945
        %v993 = vmax.f32 %v991, %v947
        %v994 = vmax.f32 %v992, %v949
        %v995 = vmax.f32 %v993, %v951
        %v996 = vmax.f32 %v994, %v953
        %v997 = vmax.f32 %v995, %v955
        %v998 = vmax.f32 %v996, %v957
        %v999 = vmax.f32 %v997, %v959
        %v1000 = vmax.f32 %v998, %v961
        %v1001 = vmax.f32 %v999, %v963
        %v1002 = vmax.f32 %v1000, %v965
        %v1003 = vmax.f32 %v1001, %v967
        %v1004 = vmax.f32 %v1002, %v969
        %v1005 = vmax.f32 %v1003, %v971
        %v1006 = vmax.f32 %v1004, %v973
        %v1007 = vmax.f32 %v1005, %v975
        %v1008 = vmax.f32 %v1006, %v1007
        %v1009 = vrot.slane %v1008, 4
        %v1010 = vmax.f32 %v1008, %v1009
        %v1011 = vrot.slane %v1010, 2
        %v1012 = vmax.f32 %v1010, %v1011
        %v1013 = vrot.slane %v1012, 1
        %v1014 = vmax.f32 %v1012, %v1013
        %v1015 = vmax.f32 %v914, %v918
        %v1016 = vmax.f32 %v916, %v920
        %v1017 = vmax.f32 %v1015, %v922
        %v1018 = vmax.f32 %v1016, %v924
        %v1019 = vmax.f32 %v1017, %v926
        %v1020 = vmax.f32 %v1018, %v928
        %v1021 = vmax.f32 %v1019, %v930
        %v1022 = vmax.f32 %v1020, %v932
        %v1023 = vmax.f32 %v1021, %v934
        %v1024 = vmax.f32 %v1022, %v936
        %v1025 = vmax.f32 %v1023, %v938
        %v1026 = vmax.f32 %v1024, %v940
        %v1027 = vmax.f32 %v1025, %v942
        %v1028 = vmax.f32 %v1026, %v944
        %v1029 = vmax.f32 %v1027, %v946
        %v1030 = vmax.f32 %v1028, %v948
        %v1031 = vmax.f32 %v1029, %v950
        %v1032 = vmax.f32 %v1030, %v952
        %v1033 = vmax.f32 %v1031, %v954
        %v1034 = vmax.f32 %v1032, %v956
        %v1035 = vmax.f32 %v1033, %v958
        %v1036 = vmax.f32 %v1034, %v960
        %v1037 = vmax.f32 %v1035, %v962
        %v1038 = vmax.f32 %v1036, %v964
        %v1039 = vmax.f32 %v1037, %v966
        %v1040 = vmax.f32 %v1038, %v968
        %v1041 = vmax.f32 %v1039, %v970
        %v1042 = vmax.f32 %v1040, %v972
        %v1043 = vmax.f32 %v1041, %v974
        %v1044 = vmax.f32 %v1042, %v976
        %v1045 = vmax.f32 %v1043, %v1044
        %v1046 = vrot.slane %v1045, 4
        %v1047 = vmax.f32 %v1045, %v1046
        %v1048 = vrot.slane %v1047, 2
        %v1049 = vmax.f32 %v1047, %v1048
        %v1050 = vrot.slane %v1049, 1
        %v1051 = vmax.f32 %v1049, %v1050
        %v1054 = vcombine.low %v1014, %v1051
        %v1056 = vunpack.c.l.s4 1966171168
        %v1057 = vunpack.c.0.s8 %v1056
        %v1058 = vlaneseq
        %v1059 = vshrl.u32 %v1058, 7
        %v1060 = vsub.s32 %v1057, %v1059
        %v1061 = vrot.slane %v1054, %v1060
        %v1063 = vunpack.c.l.s4 1966171168
        %v1064 = vunpack.c.0.s8 %v1063
        %v1065 = vlaneseq
        %v1066 = vshrl.u32 %v1065, 7
        %v1067 = vsub.s32 %v1064, %v1066
        %v1068 = vrot.slane %v1061, %v1067
        %v1070 = vmax.f32 %v977, %v1068
        %v1071 = vsub.f32 %v977, %v1070
        %v1072 = vmul.f32 %v1071, 1.442695
        %v1073 = vpow.pop %v1072
        %v1075 = vlaneseq
        %v1076 = vshrl.u32 %v1075, 7
        %v1077 = vsub.s32 0, %v1076
        %v1078 = vrot.slane %v1070, %v1077
        %v1079 = vlaneseq
        %v1080 = vshrl.u32 %v1079, 7
        %v1081 = vsub.s32 1, %v1080
        %v1082 = vrot.slane %v1070, %v1081
        %v1085 = vsub.f32 %v913, %v1078
        %v1086 = vsub.f32 %v914, %v1082
        %v1087 = vsub.f32 %v915, %v1078
        %v1088 = vsub.f32 %v916, %v1082
        %v1089 = vsub.f32 %v917, %v1078
        %v1090 = vsub.f32 %v918, %v1082
        %v1091 = vsub.f32 %v919, %v1078
        %v1092 = vsub.f32 %v920, %v1082
        %v1093 = vsub.f32 %v921, %v1078
        %v1094 = vsub.f32 %v922, %v1082
        %v1095 = vsub.f32 %v923, %v1078
        %v1096 = vsub.f32 %v924, %v1082
        %v1097 = vsub.f32 %v925, %v1078
        %v1098 = vsub.f32 %v926, %v1082
        %v1099 = vsub.f32 %v927, %v1078
        %v1100 = vsub.f32 %v928, %v1082
        %v1101 = vsub.f32 %v929, %v1078
        %v1102 = vsub.f32 %v930, %v1082
        %v1103 = vsub.f32 %v931, %v1078
        %v1104 = vsub.f32 %v932, %v1082
        %v1105 = vsub.f32 %v933, %v1078
        %v1106 = vsub.f32 %v934, %v1082
        %v1107 = vsub.f32 %v935, %v1078
        %v1108 = vsub.f32 %v936, %v1082
        %v1109 = vsub.f32 %v937, %v1078
        %v1110 = vsub.f32 %v938, %v1082
        %v1111 = vsub.f32 %v939, %v1078
        %v1112 = vsub.f32 %v940, %v1082
        %v1113 = vsub.f32 %v941, %v1078
        %v1114 = vsub.f32 %v942, %v1082
        %v1115 = vsub.f32 %v943, %v1078
        %v1116 = vsub.f32 %v944, %v1082
        %v1117 = vsub.f32 %v945, %v1078
        %v1118 = vsub.f32 %v946, %v1082
        %v1119 = vsub.f32 %v947, %v1078
        %v1120 = vsub.f32 %v948, %v1082
        %v1121 = vsub.f32 %v949, %v1078
        %v1122 = vsub.f32 %v950, %v1082
        %v1123 = vsub.f32 %v951, %v1078
        %v1124 = vsub.f32 %v952, %v1082
        %v1125 = vsub.f32 %v953, %v1078
        %v1126 = vsub.f32 %v954, %v1082
        %v1127 = vsub.f32 %v955, %v1078
        %v1128 = vsub.f32 %v956, %v1082
        %v1129 = vsub.f32 %v957, %v1078
        %v1130 = vsub.f32 %v958, %v1082
        %v1131 = vsub.f32 %v959, %v1078
        %v1132 = vsub.f32 %v960, %v1082
        %v1133 = vsub.f32 %v961, %v1078
        %v1134 = vsub.f32 %v962, %v1082
        %v1135 = vsub.f32 %v963, %v1078
        %v1136 = vsub.f32 %v964, %v1082
        %v1137 = vsub.f32 %v965, %v1078
        %v1138 = vsub.f32 %v966, %v1082
        %v1139 = vsub.f32 %v967, %v1078
        %v1140 = vsub.f32 %v968, %v1082
        %v1141 = vsub.f32 %v969, %v1078
        %v1142 = vsub.f32 %v970, %v1082
        %v1143 = vsub.f32 %v971, %v1078
        %v1144 = vsub.f32 %v972, %v1082
        %v1145 = vsub.f32 %v973, %v1078
        %v1146 = vsub.f32 %v974, %v1082
        %v1147 = vsub.f32 %v975, %v1078
        %v1148 = vsub.f32 %v976, %v1082
        %v1149 = vmul.f32 %v1085, 1.442695
        %v1150 = vpow.pop %v1149
        %v1151 = vmul.f32 %v1086, 1.442695
        %v1152 = vpow.pop %v1151
        %v1153 = vmul.f32 %v1087, 1.442695
        %v1154 = vpow.pop %v1153
        %v1155 = vmul.f32 %v1088, 1.442695
        %v1156 = vpow.pop %v1155
        %v1157 = vmul.f32 %v1089, 1.442695
        %v1158 = vpow.pop %v1157
        %v1159 = vmul.f32 %v1090, 1.442695
        %v1160 = vpow.pop %v1159
        %v1161 = vmul.f32 %v1091, 1.442695
        %v1162 = vpow.pop %v1161
        %v1163 = vmul.f32 %v1092, 1.442695
        %v1164 = vpow.pop %v1163
        %v1165 = vmul.f32 %v1093, 1.442695
        %v1166 = vpow.pop %v1165
        %v1167 = vmul.f32 %v1094, 1.442695
        %v1168 = vpow.pop %v1167
        %v1169 = vmul.f32 %v1095, 1.442695
        %v1170 = vpow.pop %v1169
        %v1171 = vmul.f32 %v1096, 1.442695
        %v1172 = vpow.pop %v1171
        %v1173 = vmul.f32 %v1097, 1.442695
        %v1174 = vpow.pop %v1173
        %v1175 = vmul.f32 %v1098, 1.442695
        %v1176 = vpow.pop %v1175
        %v1177 = vmul.f32 %v1099, 1.442695
        %v1178 = vpow.pop %v1177
        %v1179 = vmul.f32 %v1100, 1.442695
        %v1180 = vpow.pop %v1179
        %v1181 = vmul.f32 %v1101, 1.442695
        %v1182 = vpow.pop %v1181
        %v1183 = vmul.f32 %v1102, 1.442695
        %v1184 = vpow.pop %v1183
        %v1185 = vmul.f32 %v1103, 1.442695
        %v1186 = vpow.pop %v1185
        %v1187 = vmul.f32 %v1104, 1.442695
        %v1188 = vpow.pop %v1187
        %v1189 = vmul.f32 %v1105, 1.442695
        %v1190 = vpow.pop %v1189
        %v1191 = vmul.f32 %v1106, 1.442695
        %v1192 = vpow.pop %v1191
        %v1193 = vmul.f32 %v1107, 1.442695
        %v1194 = vpow.pop %v1193
        %v1195 = vmul.f32 %v1108, 1.442695
        %v1196 = vpow.pop %v1195
        %v1197 = vmul.f32 %v1109, 1.442695
        %v1198 = vpow.pop %v1197
        %v1199 = vmul.f32 %v1110, 1.442695
        %v1200 = vpow.pop %v1199
        %v1201 = vmul.f32 %v1111, 1.442695
        %v1202 = vpow.pop %v1201
        %v1203 = vmul.f32 %v1112, 1.442695
        %v1204 = vpow.pop %v1203
        %v1205 = vmul.f32 %v1113, 1.442695
        %v1206 = vpow.pop %v1205
        %v1207 = vmul.f32 %v1114, 1.442695
        %v1208 = vpow.pop %v1207
        %v1209 = vmul.f32 %v1115, 1.442695
        %v1210 = vpow.pop %v1209
        %v1211 = vmul.f32 %v1116, 1.442695
        %v1212 = vpow.pop %v1211
        %v1213 = vmul.f32 %v1117, 1.442695
        %v1214 = vpow.pop %v1213
        %v1215 = vmul.f32 %v1118, 1.442695
        %v1216 = vpow.pop %v1215
        %v1217 = vmul.f32 %v1119, 1.442695
        %v1218 = vpow.pop %v1217
        %v1219 = vmul.f32 %v1120, 1.442695
        %v1220 = vpow.pop %v1219
        %v1221 = vmul.f32 %v1121, 1.442695
        %v1222 = vpow.pop %v1221
        %v1223 = vmul.f32 %v1122, 1.442695
        %v1224 = vpow.pop %v1223
        %v1225 = vmul.f32 %v1123, 1.442695
        %v1226 = vpow.pop %v1225
        %v1227 = vmul.f32 %v1124, 1.442695
        %v1228 = vpow.pop %v1227
        %v1229 = vmul.f32 %v1125, 1.442695
        %v1230 = vpow.pop %v1229
        %v1231 = vmul.f32 %v1126, 1.442695
        %v1232 = vpow.pop %v1231
        %v1233 = vmul.f32 %v1127, 1.442695
        %v1234 = vpow.pop %v1233
        %v1235 = vmul.f32 %v1128, 1.442695
        %v1236 = vpow.pop %v1235
        %v1237 = vmul.f32 %v1129, 1.442695
        %v1238 = vpow.pop %v1237
        %v1239 = vmul.f32 %v1130, 1.442695
        %v1240 = vpow.pop %v1239
        %v1241 = vmul.f32 %v1131, 1.442695
        %v1242 = vpow.pop %v1241
        %v1243 = vmul.f32 %v1132, 1.442695
        %v1244 = vpow.pop %v1243
        %v1245 = vmul.f32 %v1133, 1.442695
        %v1246 = vpow.pop %v1245
        %v1247 = vmul.f32 %v1134, 1.442695
        %v1248 = vpow.pop %v1247
        %v1249 = vmul.f32 %v1135, 1.442695
        %v1250 = vpow.pop %v1249
        %v1251 = vmul.f32 %v1136, 1.442695
        %v1252 = vpow.pop %v1251
        %v1253 = vmul.f32 %v1137, 1.442695
        %v1254 = vpow.pop %v1253
        %v1255 = vmul.f32 %v1138, 1.442695
        %v1256 = vpow.pop %v1255
        %v1257 = vmul.f32 %v1139, 1.442695
        %v1258 = vpow.pop %v1257
        %v1259 = vmul.f32 %v1140, 1.442695
        %v1260 = vpow.pop %v1259
        %v1261 = vmul.f32 %v1141, 1.442695
        %v1262 = vpow.pop %v1261
        %v1263 = vmul.f32 %v1142, 1.442695
        %v1264 = vpow.pop %v1263
        %v1265 = vmul.f32 %v1143, 1.442695
        %v1266 = vpow.pop %v1265
        %v1267 = vmul.f32 %v1144, 1.442695
        %v1268 = vpow.pop %v1267
        %v1269 = vmul.f32 %v1145, 1.442695
        %v1270 = vpow.pop %v1269
        %v1271 = vmul.f32 %v1146, 1.442695
        %v1272 = vpow.pop %v1271
        %v1273 = vmul.f32 %v1147, 1.442695
        %v1274 = vpow.pop %v1273
        %v1275 = vmul.f32 %v1148, 1.442695
        %v1276 = vpow.pop %v1275
        %v1277 = vld [vmem:[#allocation4] sm:$0x3]
        %v1278 = vmul.f32 %v1073, %v1277
        %v1279 = vadd.f32 %v1150, %v1154
        %v1280 = vadd.f32 %v1279, %v1158
        %v1281 = vadd.f32 %v1280, %v1162
        %v1282 = vadd.f32 %v1281, %v1166
        %v1283 = vadd.f32 %v1282, %v1170
        %v1284 = vadd.f32 %v1283, %v1174
        %v1285 = vadd.f32 %v1284, %v1178
        %v1286 = vadd.f32 %v1285, %v1182
        %v1287 = vadd.f32 %v1286, %v1186
        %v1288 = vadd.f32 %v1287, %v1190
        %v1289 = vadd.f32 %v1288, %v1194
        %v1290 = vadd.f32 %v1289, %v1198
        %v1291 = vadd.f32 %v1290, %v1202
        %v1292 = vadd.f32 %v1291, %v1206
        %v1293 = vadd.f32 %v1292, %v1210
        %v1294 = vadd.f32 %v1293, %v1214
        %v1295 = vadd.f32 %v1294, %v1218
        %v1296 = vadd.f32 %v1295, %v1222
        %v1297 = vadd.f32 %v1296, %v1226
        %v1298 = vadd.f32 %v1297, %v1230
        %v1299 = vadd.f32 %v1298, %v1234
        %v1300 = vadd.f32 %v1299, %v1238
        %v1301 = vadd.f32 %v1300, %v1242
        %v1302 = vadd.f32 %v1301, %v1246
        %v1303 = vadd.f32 %v1302, %v1250
        %v1304 = vadd.f32 %v1303, %v1254
        %v1305 = vadd.f32 %v1304, %v1258
        %v1306 = vadd.f32 %v1305, %v1262
        %v1307 = vadd.f32 %v1306, %v1266
        %v1308 = vadd.f32 %v1307, %v1270
        %v1309 = vadd.f32 %v1308, %v1274
        %v1310 = vrot.slane %v1309, 4
        %v1311 = vadd.f32 %v1309, %v1310
        %v1312 = vrot.slane %v1311, 2
        %v1313 = vadd.f32 %v1311, %v1312
        %v1314 = vrot.slane %v1313, 1
        %v1315 = vadd.f32 %v1313, %v1314
        %v1316 = vadd.f32 %v1152, %v1156
        %v1317 = vadd.f32 %v1316, %v1160
        %v1318 = vadd.f32 %v1317, %v1164
        %v1319 = vadd.f32 %v1318, %v1168
        %v1320 = vadd.f32 %v1319, %v1172
        %v1321 = vadd.f32 %v1320, %v1176
        %v1322 = vadd.f32 %v1321, %v1180
        %v1323 = vadd.f32 %v1322, %v1184
        %v1324 = vadd.f32 %v1323, %v1188
        %v1325 = vadd.f32 %v1324, %v1192
        %v1326 = vadd.f32 %v1325, %v1196
        %v1327 = vadd.f32 %v1326, %v1200
        %v1328 = vadd.f32 %v1327, %v1204
        %v1329 = vadd.f32 %v1328, %v1208
        %v1330 = vadd.f32 %v1329, %v1212
        %v1331 = vadd.f32 %v1330, %v1216
        %v1332 = vadd.f32 %v1331, %v1220
        %v1333 = vadd.f32 %v1332, %v1224
        %v1334 = vadd.f32 %v1333, %v1228
        %v1335 = vadd.f32 %v1334, %v1232
        %v1336 = vadd.f32 %v1335, %v1236
        %v1337 = vadd.f32 %v1336, %v1240
        %v1338 = vadd.f32 %v1337, %v1244
        %v1339 = vadd.f32 %v1338, %v1248
        %v1340 = vadd.f32 %v1339, %v1252
        %v1341 = vadd.f32 %v1340, %v1256
        %v1342 = vadd.f32 %v1341, %v1260
        %v1343 = vadd.f32 %v1342, %v1264
        %v1344 = vadd.f32 %v1343, %v1268
        %v1345 = vadd.f32 %v1344, %v1272
        %v1346 = vadd.f32 %v1345, %v1276
        %v1347 = vrot.slane %v1346, 4
        %v1348 = vadd.f32 %v1346, %v1347
        %v1349 = vrot.slane %v1348, 2
        %v1350 = vadd.f32 %v1348, %v1349
        %v1351 = vrot.slane %v1350, 1
        %v1352 = vadd.f32 %v1350, %v1351
        %v1355 = vcombine.low %v1315, %v1352
        %v1357 = vunpack.c.l.s4 1966171168
        %v1358 = vunpack.c.0.s8 %v1357
        %v1359 = vlaneseq
        %v1360 = vshrl.u32 %v1359, 7
        %v1361 = vsub.s32 %v1358, %v1360
        %v1362 = vrot.slane %v1355, %v1361
        %v1364 = vunpack.c.l.s4 1966171168
        %v1365 = vunpack.c.0.s8 %v1364
        %v1366 = vlaneseq
        %v1367 = vshrl.u32 %v1366, 7
        %v1368 = vsub.s32 %v1365, %v1367
        %v1369 = vrot.slane %v1362, %v1368
        %v1371 = vadd.f32 %v1278, %v1369
        %v1372 = vlaneseq
        %vm1373 = vcmp.ge.s32.totalorder %v1372, 0
        %vm1374 = vcmp.lt.s32.totalorder %v1372, 256
        %vm1375 = vmand %vm1373, %vm1374
        %1376 = vst.msk [vmem:[#allocation4] sm:$0x3] %vm1375, %v1371
        %1377 = vst.msk [vmem:[#allocation3] sm:$0x3] %vm1375, %v1070
        %v1378 = vld [vmem:[%s317] sm:$0xff]
        %v1379 = vld [vmem:[%s317 + $0x8] sm:$0xff]
        %v1380 = vld [vmem:[%s317 + $0x10] sm:$0xff]
        %v1381 = vld [vmem:[%s317 + $0x18] sm:$0xff]
        %v1382 = vpack.c.bf16 %v1154, %v1150
        %v1383 = vpack.c.bf16 %v1156, %v1152
        %v1384 = vpack.c.bf16 %v1162, %v1158
        %v1385 = vpack.c.bf16 %v1164, %v1160
        %v1386 = vpack.c.bf16 %v1170, %v1166
        %v1387 = vpack.c.bf16 %v1172, %v1168
        %v1388 = vpack.c.bf16 %v1178, %v1174
        %v1389 = vpack.c.bf16 %v1180, %v1176
        %v1390 = vpack.c.bf16 %v1186, %v1182
        %v1391 = vpack.c.bf16 %v1188, %v1184
        %v1392 = vpack.c.bf16 %v1194, %v1190
        %v1393 = vpack.c.bf16 %v1196, %v1192
        %v1394 = vpack.c.bf16 %v1202, %v1198
        %v1395 = vpack.c.bf16 %v1204, %v1200
        %v1396 = vpack.c.bf16 %v1210, %v1206
        %v1397 = vpack.c.bf16 %v1212, %v1208
        %v1398 = vpack.c.bf16 %v1218, %v1214
        %v1399 = vpack.c.bf16 %v1220, %v1216
        %v1400 = vpack.c.bf16 %v1226, %v1222
        %v1401 = vpack.c.bf16 %v1228, %v1224
        %v1402 = vpack.c.bf16 %v1234, %v1230
        %v1403 = vpack.c.bf16 %v1236, %v1232
        %v1404 = vpack.c.bf16 %v1242, %v1238
        %v1405 = vpack.c.bf16 %v1244, %v1240
        %v1406 = vpack.c.bf16 %v1250, %v1246
        %v1407 = vpack.c.bf16 %v1252, %v1248
        %v1408 = vpack.c.bf16 %v1258, %v1254
        %v1409 = vpack.c.bf16 %v1260, %v1256
        %v1410 = vpack.c.bf16 %v1266, %v1262
        %v1411 = vpack.c.bf16 %v1268, %v1264
        %v1412 = vpack.c.bf16 %v1274, %v1270
        %v1413 = vpack.c.bf16 %v1276, %v1272
        %v1418 = vunpack.c.l.b16 %v1378
        %v1419 = vunpack.c.h.b16 %v1378
        %v1420 = vunpack.c.l.b16 %v1379
        %v1421 = vunpack.c.h.b16 %v1379
        %v1422 = vunpack.c.l.b16 %v1380
        %v1423 = vunpack.c.h.b16 %v1380
        %v1424 = vunpack.c.l.b16 %v1381
        %v1425 = vunpack.c.h.b16 %v1381
        %v1426 = vpack.c.b16 %v1420, %v1418
        %v1427 = vpack.c.b16 %v1421, %v1419
        %v1428 = vpack.c.b16 %v1424, %v1422
        %v1429 = vpack.c.b16 %v1425, %v1423
        %1434 = vmatprep.subr.bf16.mxu0 %v1383
        %1435 = vmatpush1.bf16.msra.mxu0 %v1382
        %1436 = vmatprep.subr.bf16.mxu0 %v1385
        %1437 = vmatpush1.bf16.msra.mxu0 %v1384
        %1438 = vmatprep.subr.bf16.mxu0 %v1387
        %1439 = vmatpush1.bf16.msra.mxu0 %v1386
        %1440 = vmatprep.subr.bf16.mxu0 %v1389
        %1441 = vmatpush1.bf16.msra.mxu0 %v1388
        %1442 = vmatprep.subr.bf16.mxu0 %v1391
        %1443 = vmatpush1.bf16.msra.mxu0 %v1390
        %1444 = vmatprep.subr.bf16.mxu0 %v1393
        %1445 = vmatpush1.bf16.msra.mxu0 %v1392
        %1446 = vmatprep.subr.bf16.mxu0 %v1395
        %1447 = vmatpush1.bf16.msra.mxu0 %v1394
        %1448 = vmatprep.subr.bf16.mxu0 %v1397
        %1449 = vmatpush1.bf16.msra.mxu0 %v1396
        %1450 = vmatprep.subr.bf16.mxu0 %v1399
        %1451 = vmatpush1.bf16.msra.mxu0 %v1398
        %1452 = vmatprep.subr.bf16.mxu0 %v1401
        %1453 = vmatpush1.bf16.msra.mxu0 %v1400
        %1454 = vmatprep.subr.bf16.mxu0 %v1403
        %1455 = vmatpush1.bf16.msra.mxu0 %v1402
        %1456 = vmatprep.subr.bf16.mxu0 %v1405
        %1457 = vmatpush1.bf16.msra.mxu0 %v1404
        %1458 = vmatprep.subr.bf16.mxu0 %v1407
        %1459 = vmatpush1.bf16.msra.mxu0 %v1406
        %1460 = vmatprep.subr.bf16.mxu0 %v1409
        %1461 = vmatpush1.bf16.msra.mxu0 %v1408
        %1462 = vmatprep.subr.bf16.mxu0 %v1411
        %1463 = vmatpush1.bf16.msra.mxu0 %v1410
        %1464 = vmatprep.subr.bf16.mxu0 %v1413
        %1465 = vmatpush1.bf16.msra.mxu0 %v1412
        %1466 = vmatprep.mubr.bf16.mxu0 %v1427
        %1467 = vmatmul.mubr.bf16.gmra.mrb[0].mxu0 %v1426
        %v1468 = vpop.f32.mrb[0].mxu0
        %v1469 = vadd.f32 0.0, %v1468
        %v1470 = vpop.f32.mrb[0].mxu0
        %v1471 = vadd.f32 0.0, %v1470
        %v1472 = vpop.f32.mrb[0].mxu0
        %v1473 = vadd.f32 0.0, %v1472
        %v1474 = vpop.f32.mrb[0].mxu0
        %v1475 = vadd.f32 0.0, %v1474
        %1476 = vmatprep.mubr.bf16.mxu0 %v1429
        %1477 = vmatmul.mubr.bf16.gmra.mrb[0].mxu0 %v1428
        %v1478 = vpop.f32.mrb[0].mxu0
        %v1479 = vadd.f32 0.0, %v1478
        %v1480 = vpop.f32.mrb[0].mxu0
        %v1481 = vadd.f32 0.0, %v1480
        %v1482 = vpop.f32.mrb[0].mxu0
        %v1483 = vadd.f32 0.0, %v1482
        %v1484 = vpop.f32.mrb[0].mxu0
        %v1485 = vadd.f32 0.0, %v1484
        %1486 = vdwg.mxu0
        %v1487 = vld [vmem:[#allocation5] sm:$0xff]
        %v1488 = vld [vmem:[#allocation5 + $0x8] sm:$0xff]
        %v1489 = vld [vmem:[#allocation5 + $0x10] sm:$0xff]
        %v1490 = vld [vmem:[#allocation5 + $0x18] sm:$0xff]
        %v1491 = vld [vmem:[#allocation5 + $0x20] sm:$0xff]
        %v1492 = vld [vmem:[#allocation5 + $0x28] sm:$0xff]
        %v1493 = vld [vmem:[#allocation5 + $0x30] sm:$0xff]
        %v1494 = vld [vmem:[#allocation5 + $0x38] sm:$0xff]
        %v1496 = vlaneseq
        %v1497 = vshrl.u32 %v1496, 7
        %v1498 = vsub.s32 0, %v1497
        %v1499 = vrot.slane %v1073, %v1498
        %v1500 = vlaneseq
        %v1501 = vshrl.u32 %v1500, 7
        %v1502 = vsub.s32 1, %v1501
        %v1503 = vrot.slane %v1073, %v1502
        %v1506 = vmul.f32 %v1487, %v1499
        %v1507 = vmul.f32 %v1488, %v1503
        %v1508 = vmul.f32 %v1489, %v1499
        %v1509 = vmul.f32 %v1490, %v1503
        %v1510 = vmul.f32 %v1491, %v1499
        %v1511 = vmul.f32 %v1492, %v1503
        %v1512 = vmul.f32 %v1493, %v1499
        %v1513 = vmul.f32 %v1494, %v1503
        %v1514 = vadd.f32 %v1506, %v1469
        %v1515 = vadd.f32 %v1507, %v1471
        %v1516 = vadd.f32 %v1508, %v1473
        %v1517 = vadd.f32 %v1509, %v1475
        %v1518 = vadd.f32 %v1510, %v1479
        %v1519 = vadd.f32 %v1511, %v1481
        %v1520 = vadd.f32 %v1512, %v1483
        %v1521 = vadd.f32 %v1513, %v1485
        %1522 = vst [vmem:[#allocation5] sm:$0xff] %v1514
        %1523 = vst [vmem:[#allocation5 + $0x8] sm:$0xff] %v1515
        %1524 = vst [vmem:[#allocation5 + $0x10] sm:$0xff] %v1516
        %1525 = vst [vmem:[#allocation5 + $0x18] sm:$0xff] %v1517
        %1526 = vst [vmem:[#allocation5 + $0x20] sm:$0xff] %v1518
        %1527 = vst [vmem:[#allocation5 + $0x28] sm:$0xff] %v1519
        %1528 = vst [vmem:[#allocation5 + $0x30] sm:$0xff] %v1520
        %1529 = vst [vmem:[#allocation5 + $0x38] sm:$0xff] %v1521
        %p1530 = scmp.eq.s32.totalorder %s26, 1
        // Predicated region
        $region102: #{tpu_custom_call.1} parent=88 // pred_check
          %p1531 = pneg %p1530
        $region103: #{tpu_custom_call.1} parent=88 // pred_check_branch
          %1533 = sbr.rel (%p1531) target = $region105
        $region104: #{tpu_custom_call.1} parent=88 // pred_region
          %s1534 = sld [smem:[#allocation6]]
          %v1535 = vld [vmem:[#allocation4] sm:$0x3]
          %v1536 = vstv %s1534
          %v1537 = vrcp.pop %v1535
          %v1538 = vmul.f32 %v1536, %v1537
          %v1539 = vld [vmem:[#allocation5] sm:$0xff]
          %v1540 = vld [vmem:[#allocation5 + $0x8] sm:$0xff]
          %v1541 = vld [vmem:[#allocation5 + $0x10] sm:$0xff]
          %v1542 = vld [vmem:[#allocation5 + $0x18] sm:$0xff]
          %v1543 = vld [vmem:[#allocation5 + $0x20] sm:$0xff]
          %v1544 = vld [vmem:[#allocation5 + $0x28] sm:$0xff]
          %v1545 = vld [vmem:[#allocation5 + $0x30] sm:$0xff]
          %v1546 = vld [vmem:[#allocation5 + $0x38] sm:$0xff]
          %v1548 = vlaneseq
          %v1549 = vshrl.u32 %v1548, 7
          %v1550 = vsub.s32 0, %v1549
          %v1551 = vrot.slane %v1538, %v1550
          %v1552 = vlaneseq
          %v1553 = vshrl.u32 %v1552, 7
          %v1554 = vsub.s32 1, %v1553
          %v1555 = vrot.slane %v1538, %v1554
          %v1558 = vmul.f32 %v1539, %v1551
          %v1559 = vmul.f32 %v1540, %v1555
          %v1560 = vmul.f32 %v1541, %v1551
          %v1561 = vmul.f32 %v1542, %v1555
          %v1562 = vmul.f32 %v1543, %v1551
          %v1563 = vmul.f32 %v1544, %v1555
          %v1564 = vmul.f32 %v1545, %v1551
          %v1565 = vmul.f32 %v1546, %v1555
          %v1566 = vld [vmem:[%s310] sm:$0xff]
          %v1567 = vld [vmem:[%s310 + $0x8] sm:$0xff]
          %v1568 = vld [vmem:[%s310 + $0x10] sm:$0xff]
          %v1569 = vld [vmem:[%s310 + $0x18] sm:$0xff]
          %v1570 = vld [vmem:[%s310 + $0x20] sm:$0xff]
          %v1571 = vld [vmem:[%s310 + $0x28] sm:$0xff]
          %v1572 = vld [vmem:[%s310 + $0x30] sm:$0xff]
          %v1573 = vld [vmem:[%s310 + $0x38] sm:$0xff]
          %v1574 = vadd.f32 %v1558, %v1566
          %v1575 = vadd.f32 %v1559, %v1567
          %v1576 = vadd.f32 %v1560, %v1568
          %v1577 = vadd.f32 %v1561, %v1569
          %v1578 = vadd.f32 %v1562, %v1570
          %v1579 = vadd.f32 %v1563, %v1571
          %v1580 = vadd.f32 %v1564, %v1572
          %v1581 = vadd.f32 %v1565, %v1573
          %1582 = vst [vmem:[%s352] sm:$0xff] %v1574
          %1583 = vst [vmem:[%s352 + $0x8] sm:$0xff] %v1575
          %1584 = vst [vmem:[%s352 + $0x10] sm:$0xff] %v1576
          %1585 = vst [vmem:[%s352 + $0x18] sm:$0xff] %v1577
          %1586 = vst [vmem:[%s352 + $0x20] sm:$0xff] %v1578
          %1587 = vst [vmem:[%s352 + $0x28] sm:$0xff] %v1579
          %1588 = vst [vmem:[%s352 + $0x30] sm:$0xff] %v1580
          %1589 = vst [vmem:[%s352 + $0x38] sm:$0xff] %v1581
        $region105: #{tpu_custom_call.1} parent=88 // pred_fallthru
          _
        %s1590 = sand.u32 %s153, 1
        %s1591 = scalar_lea.sflag [#allocation10], %s1590
        %s1592 = sand.u32 %s153, 1
        %s1593 = smul.addr %s1592, 64
        %s1594 = scalar_lea.vmem [#allocation9], %s1593
        // Predicated region
        $region106: #{tpu_custom_call.1} parent=88 // pred_check
          %p1595 = pneg %p163
        $region107: #{tpu_custom_call.1} parent=88 // pred_check_branch
          %1597 = sbr.rel (%p1595) target = $region109
        $region108: #{tpu_custom_call.1} parent=88 // pred_region
          %s1598 = smul.u32 2, %s25
          %s1600 = ssub.s32 1024, 1024
          %1601 = vsyncadd %s1591, %s1600
          %s1602 = smul.addr %s24, 16
          %s1603 = sadd.s32 %s1598, %s1602
          %s1604 = smul.addr %s1603, 128
          %s1605 = scalar_lea.hbm %s4, %s1604
          %s1606 = sshll.u32 %s1594, 4
          %s1607 = int_to_ptr.vmem [resolvable:$true] %s1606
          %1612 = dma.vmem_to_hbm [thread:$0]  %s1607, 1024, %s1605, %s1591, 256, 512, 16
        $region109: #{tpu_custom_call.1} parent=88 // pred_fallthru
          _
      $region89: #{tpu_custom_call.1} parent=5 // pred_fallthru
        _
      %p1613 = scmp.le.s32.totalorder 2, %s14
      // Predicated region
      $region110: #{tpu_custom_call.1} parent=5 // pred_check
        %p1614 = pneg %p1613
      $region111: #{tpu_custom_call.1} parent=5 // pred_check_branch
        %1616 = sbr.rel (%p1614) target = $region113
      $region112: #{tpu_custom_call.1} parent=5 // pred_region
        %s1617 = ssub.s32 %s14, 2
        // Predicated region
        $region114: #{tpu_custom_call.1} parent=112 // pred_check
          %p1618 = pneg %p169
        $region115: #{tpu_custom_call.1} parent=112 // pred_check_branch
          %1620 = sbr.rel (%p1618) target = $region117
        $region116: #{tpu_custom_call.1} parent=112 // pred_region
          %s1621 = sand.u32 %s154, 1
          %s1622 = scalar_lea.sflag [#allocation10], %s1621
          %s1623 = sand.u32 %s154, 1
          %s1624 = smul.addr %s1623, 64
          %s1625 = scalar_lea.vmem [#allocation9], %s1624
          %1626 = dma.done %s1622, 1024
        $region117: #{tpu_custom_call.1} parent=112 // pred_fallthru
          _
      $region113: #{tpu_custom_call.1} parent=5 // pred_fallthru
        _
    $region6: #{tpu_custom_call.1} parent=1 // loop_footer
      %s18 = sadd.s32 1, %s14
    $region7: #{tpu_custom_call.1} parent=1 // loop_footer_branch
      %13 = sbr.rel target = $region3
    $region8: #{tpu_custom_call.1} parent=1 // loop_exit
      _
    %1627 = vsyncpa [#allocation10], 1
    %s1628 = scalar_lea.sflag [#allocation10], 1
    %1629 = vsyncpa %s1628, 1

</llo_original>
